<compile_context>
chip_gen: v6e
topology: v6e:2x2x1
jax: 0.10.0
libtpu: 0.0.40
codegen_flags: <defaults>
</compile_context>

<pallas_src>
import functools

import jax
import jax.numpy as jnp
import numpy as np
from jax.experimental import pallas as pl
from jax.experimental.pallas import tpu as pltpu


# --------------------------------------------------------------------------
# Kernel
# --------------------------------------------------------------------------
def _linear_att_kernel(xpad_ref, mask_ref, bd_ref,
                       wconv_ref, bconv_ref,
                       wqkv_ref, bqkv_ref,
                       wo_ref, bo_ref,
                       wco_ref, bco_ref,
                       out_ref, *, L, C, Cin, d, alpha):
    TB = xpad_ref.shape[0]          # batch tile (static)
    M = TB * L
    cd = wqkv_ref.dtype             # MXU compute dtype (bf16 by default, f32 optional)

    def mm(a, w):                   # MXU matmul with f32 accumulation
        return jnp.dot(a.astype(cd), w, preferred_element_type=jnp.float32)

    # keep the mask as an (M, 1) column; broadcast implicitly at use sites
    mask_col = mask_ref[...].reshape(M, 1)

    # --- feed_forward: dilated Conv1d(k=3) as 3 accumulating matmuls over
    #     sublane-shifted views of the single padded input block.
    xp = xpad_ref[...]                                                # (TB, L+2d, Cin) f32
    taps = [xp[:, k * d:k * d + L, :].reshape(M, Cin) for k in range(3)]
    ff = bconv_ref[...]                                               # (1, C) -> broadcasts up
    for k in range(3):
        ff = ff + mm(taps[k], wconv_ref[k])
    ff = jnp.maximum(ff, 0.0)                                         # (M, C) f32

    # --- InstanceNorm1d (affine=False, eps=1e-5): per batch element over L
    ff_b = ff.reshape(TB, L, C)
    mean = jnp.mean(ff_b, axis=1, keepdims=True)
    var = jnp.mean((ff_b - mean) ** 2, axis=1, keepdims=True)
    qin = ((ff_b - mean) * jax.lax.rsqrt(var + 1e-5)).reshape(M, C)

    # --- fused q/k/v projection ("elu" == sigmoid on q and k only)
    qkv = mm(qin, wqkv_ref[...]) + bqkv_ref[...]                      # (M, 3C) f32
    q_f = jax.nn.sigmoid(qkv[:, :C]).reshape(TB, L, C)
    k_f = jax.nn.sigmoid(qkv[:, C:2 * C]).reshape(TB, L, C)
    v_f = qkv[:, 2 * C:].reshape(TB, L, C)

    bd = bd_ref[...]                                                  # (C, C) block-diag head mask
    qp = q_f.astype(cd)
    kp = k_f.astype(cd)
    vp = v_f.astype(cd)

    # --- linear attention, all heads at once via block-diagonal masked KV.
    # TODO(synk): for C >= 256 switch to per-head batched matmuls + an XLU
    # per-head zden reduction; the mask trick wastes (H-1)/H MXU work there.
    kv = jnp.einsum('bld,ble->bde', kp, vp,
                    preferred_element_type=jnp.float32) * bd          # (TB, C, C) f32
    ksum = jnp.sum(k_f, axis=1, keepdims=True) + 1e-6                 # (TB, 1, C) f32
    zden = jnp.dot((q_f * ksum).reshape(M, C), bd,
                   preferred_element_type=jnp.float32)                # (M, C) f32, per-head denom
    # zden > 0 (sigmoid products + eps); EUP approx reciprocal + one Newton
    # step (~1e-7 relative vs. the exact divide of the reference).
    r = pl.reciprocal(zden, approx=True)
    z = r * (2.0 - zden * r)
    att = jnp.einsum('bld,bde->ble', qp, kv.astype(cd),
                     preferred_element_type=jnp.float32).reshape(M, C) * z
    att = mm(att, wo_ref[...]) + bo_ref[...]
    att = att * mask_col

    # --- alpha residual, 1x1 conv_out, final residual + mask
    y = alpha * att + ff
    y = mm(y, wco_ref[...]) + bco_ref[...]
    # TODO(synk): nn.Dropout layers are identity here (eval mode, no RNG in kernel).

    x_orig = taps[1]                             # center tap == original (unpadded) input, f32
    out_ref[...] = ((x_orig + y) * mask_col).reshape(TB, L, C)   # channels-last, lane-dense in C


# --------------------------------------------------------------------------
# VMEM sizing / tile selection (approximate, (8,128)-padding aware)
# --------------------------------------------------------------------------
def _rup(x, m):
    return ((x + m - 1) // m) * m


def _tile_bytes(shape, itemsize=4):
    """Approximate VMEM footprint of a tile incl. (8,128) sublane/lane padding."""
    lead = 1
    for s in shape[:-2]:
        lead *= s
    return lead * _rup(shape[-2], 8) * _rup(shape[-1], 128) * itemsize


def _vmem_bytes_per_step(TB, L, C, Cin, d, wbytes):
    M = TB * L
    # double-buffered pipeline blocks (inputs + output + weights)
    blocks = 2 * (
        _tile_bytes((TB, L + 2 * d, Cin))                 # padded activations
        + _tile_bytes((TB, L, 1))                         # mask
        + _tile_bytes((TB, L, C))                         # output
        + _tile_bytes((C, C))                             # block-diag head mask
        + _tile_bytes((3, Cin, C), wbytes) + _tile_bytes((1, C))
        + _tile_bytes((C, 3 * C), wbytes) + _tile_bytes((1, 3 * C))
        + 2 * (_tile_bytes((C, C), wbytes) + _tile_bytes((1, C))))
    # in-kernel intermediates (rough upper bound on simultaneously-live values)
    inter = (_tile_bytes((M, 3 * C))                      # fused qkv
             + 6 * _tile_bytes((M, C))                    # ff/qin/att/y/zden/x_orig
             + 3 * _tile_bytes((M, C), wbytes)            # qp/kp/vp MXU copies
             + 2 * _tile_bytes((TB, C, C)))               # kv (+ cast copy)
    return blocks + inter


def _pick_tile_b(B, L, C, Cin, d, wbytes, budget_bytes):
    # Cap TB at B//2 so the grid has >= 2 steps and v7x's 2nd TensorCore has
    # work under dimension_semantics=("parallel",).
    tb_cap = max(1, B // 2)
    best = 1
    for tb in range(1, tb_cap + 1):
        if B % tb:
            continue
        if _vmem_bytes_per_step(tb, L, C, Cin, d, wbytes) <= budget_bytes:
            best = tb
    return best


# --------------------------------------------------------------------------
# Wrapper
# --------------------------------------------------------------------------
def prepare_params(params, *, n_heads, mxu_dtype=jnp.bfloat16):
    """One-time weight repacking (hoisted out of the per-call forward)."""
    C = params['bc1'].shape[0]
    assert C % n_heads == 0
    f32 = jnp.float32
    wc1 = params['wc1'].astype(f32)                                   # (C, Cin, 3)
    # tap k (offset k*dilation in the padded input) -> (Cin, C) weight slab
    wconv = jnp.stack([wc1[:, :, k].T for k in range(3)], axis=0)     # (3, Cin, C)
    wqkv = jnp.concatenate(
        [params['wq'].T, params['wk'].T, params['wv'].T], axis=1)     # (C, 3C)
    bqkv = jnp.concatenate(
        [params['bq'], params['bk'], params['bv']]).reshape(1, 3 * C)
    head = jnp.arange(C) // (C // n_heads)
    bd = (head[:, None] == head[None, :]).astype(f32)                 # (C, C) block-diag
    return dict(
        wconv=wconv.astype(mxu_dtype), bconv=params['bc1'].reshape(1, C).astype(f32),
        wqkv=wqkv.astype(mxu_dtype), bqkv=bqkv.astype(f32),
        wo=params['wo'].T.astype(mxu_dtype), bo=params['bo'].reshape(1, C).astype(f32),
        wco=params['wco'].T.astype(mxu_dtype), bco=params['bco'].reshape(1, C).astype(f32),
        bd=bd)


def linear_att_forward(x, mask, prep, *, dilation, alpha,
                       vmem_budget_bytes=40 * 1024 * 1024):
    """x: (B, Cin, L) NCW, mask: (B, 1, L). Returns (B, C, L) NCW.

    vmem_budget_bytes defaults to a v7x-safe value (64 MiB physical); raise it
    (e.g. to ~96 MiB) on v5e/v6e (128 MiB physical VMEM) for larger batch tiles.
    """
    B, Cin, L = x.shape
    C = prep['bconv'].shape[1]
    assert Cin == C, "residual (x + out) requires in_channel == out_channel"
    d = dilation
    wbytes = jnp.dtype(prep['wqkv'].dtype).itemsize

    # layout plumbing (glue): channels-last + ONE padded copy (no 3x tap gather)
    x_lc = jnp.transpose(x, (0, 2, 1)).astype(jnp.float32)            # (B, L, Cin)
    xpad = jnp.pad(x_lc, ((0, 0), (d, d), (0, 0)))                    # (B, L+2d, Cin)
    mask_lc = jnp.transpose(mask, (0, 2, 1)).astype(jnp.float32)      # (B, L, 1)

    TB = _pick_tile_b(B, L, C, Cin, d, wbytes, vmem_budget_bytes)
    est = _vmem_bytes_per_step(TB, L, C, Cin, d, wbytes)
    vmem_limit = max(32 * 1024 * 1024,
                     min(est, vmem_budget_bytes) + 8 * 1024 * 1024)

    kernel = functools.partial(_linear_att_kernel, L=L, C=C, Cin=Cin, d=d, alpha=alpha)

    batch3 = lambda b: (b, 0, 0)
    rep2 = lambda b: (0, 0)
    rep3 = lambda b: (0, 0, 0)
    # TODO(synk): on v7x, pipeline_mode=pl.Buffered(1) on the grid-invariant
    # weight specs below would halve their VMEM footprint.
    in_specs = [
        pl.BlockSpec((TB, L + 2 * d, Cin), batch3),                   # padded activations
        pl.BlockSpec((TB, L, 1), batch3),                             # mask
        pl.BlockSpec((C, C), rep2),                                   # block-diag head mask
        pl.BlockSpec((3, Cin, C), rep3), pl.BlockSpec((1, C), rep2),          # conv1 (3 taps)
        pl.BlockSpec((C, 3 * C), rep2), pl.BlockSpec((1, 3 * C), rep2),       # fused qkv
        pl.BlockSpec((C, C), rep2), pl.BlockSpec((1, C), rep2),               # out proj
        pl.BlockSpec((C, C), rep2), pl.BlockSpec((1, C), rep2),               # conv_out
    ]

    out_lc = pl.pallas_call(
        kernel,
        out_shape=jax.ShapeDtypeStruct((B, L, C), jnp.float32),       # channels-last from kernel
        grid=(B // TB,),
        in_specs=in_specs,
        out_specs=pl.BlockSpec((TB, L, C), batch3),
        compiler_params=pltpu.CompilerParams(
            dimension_semantics=("parallel",),
            vmem_limit_bytes=int(vmem_limit)),
    )(xpad, mask_lc, prep['bd'],
      prep['wconv'], prep['bconv'],
      prep['wqkv'], prep['bqkv'],
      prep['wo'], prep['bo'],
      prep['wco'], prep['bco'])

    # NCW permute done once in the wrapper (kernel stores stay lane-dense in C)
    return jnp.transpose(out_lc, (0, 2, 1))


# --------------------------------------------------------------------------
# Pure-JAX reference mirroring the PyTorch module (eval mode)
# --------------------------------------------------------------------------
def ref_forward(x, mask, p, *, dilation, alpha, n_heads):
    B, Cin, L = x.shape
    C = p['bc1'].shape[0]
    xpad = jnp.pad(x, ((0, 0), (0, 0), (dilation, dilation)))
    out = jnp.zeros((B, C, L), jnp.float32)
    for k in range(3):
        out = out + jnp.einsum('oi,bil->bol', p['wc1'][:, :, k],
                               xpad[:, :, k * dilation:k * dilation + L])
    ff = jnp.maximum(out + p['bc1'][None, :, None], 0.0)
    mean = jnp.mean(ff, axis=-1, keepdims=True)
    var = jnp.var(ff, axis=-1, keepdims=True)
    q = (ff - mean) / jnp.sqrt(var + 1e-5)
    q = jnp.transpose(q, (0, 2, 1))                                   # (B, L, C)
    D = C // n_heads

    def proj(xx, w, b):
        return xx @ w.T + b

    Q = jax.nn.sigmoid(proj(q, p['wq'], p['bq'])).reshape(B, L, n_heads, D).transpose(0, 2, 1, 3)
    K = jax.nn.sigmoid(proj(q, p['wk'], p['bk'])).reshape(B, L, n_heads, D).transpose(0, 2, 1, 3)
    V = proj(q, p['wv'], p['bv']).reshape(B, L, n_heads, D).transpose(0, 2, 1, 3)
    KV = jnp.einsum('bhsd,bhse->bhde', K, V)
    Z = 1.0 / jnp.einsum('bhsd,bhd->bhs', Q, K.sum(axis=2) + 1e-6)
    att = jnp.einsum('bhde,bhsd,bhs->bhse', KV, Q, Z).transpose(0, 2, 1, 3).reshape(B, L, C)
    att = proj(att, p['wo'], p['bo'])
    att = att * mask[:, 0, :, None]
    out2 = alpha * att.transpose(0, 2, 1) + ff                        # (B, C, L)
    out3 = jnp.einsum('oi,bil->bol', p['wco'], out2) + p['bco'][None, :, None]
    return (x + out3) * mask


# --------------------------------------------------------------------------
# Test
# --------------------------------------------------------------------------
if __name__ == "__main__":
    B, C, L = 2, 16, 16          # in_channel == out_channel (residual requires it)
    dilation, alpha, n_heads = 2, 0.7, 4

    key = jax.random.PRNGKey(0)
    keys = jax.random.split(key, 14)

    def rnd(k, shape):
        return jax.random.normal(k, shape, jnp.float32) * 0.1

    params = {
        'wc1': rnd(keys[0], (C, C, 3)), 'bc1': rnd(keys[1], (C,)),    # Conv1d(C,C,3)
        'wq': rnd(keys[2], (C, C)), 'bq': rnd(keys[3], (C,)),
        'wk': rnd(keys[4], (C, C)), 'bk': rnd(keys[5], (C,)),
        'wv': rnd(keys[6], (C, C)), 'bv': rnd(keys[7], (C,)),
        'wo': rnd(keys[8], (C, C)), 'bo': rnd(keys[9], (C,)),
        'wco': rnd(keys[10], (C, C)), 'bco': rnd(keys[11], (C,)),     # Conv1d(C,C,1)
    }

    x = jax.random.normal(keys[12], (B, C, L), jnp.float32)           # (B, C, L) NCW
    lengths = jnp.array([L, L - 4])
    mask = (jnp.arange(L)[None, None, :] < lengths[:, None, None]).astype(jnp.float32)  # (B,1,L)

    ref = ref_forward(x, mask, params, dilation=dilation, alpha=alpha, n_heads=n_heads)

    # f32 MXU path: exact-parity check; bf16 MXU path (default): fast path check.
    for mxu_dtype, tol in ((jnp.float32, 5e-4), (jnp.bfloat16, 3e-2)):
        prep = prepare_params(params, n_heads=n_heads, mxu_dtype=mxu_dtype)
        fwd = jax.jit(functools.partial(linear_att_forward,
                                        dilation=dilation, alpha=alpha))
        out = jax.block_until_ready(fwd(x, mask, prep))
        np.testing.assert_allclose(np.asarray(out), np.asarray(ref), rtol=tol, atol=tol)

    print("KERNEL_OK")
</pallas_src>

<mosaic_0001>
module attributes {stable_mosaic.version = 11 : i64} {
  func.func @_linear_att_kernel(%arg0: i32, %arg1: memref<1x20x16xf32, #tpu.memory_space<vmem>>, %arg2: memref<1x16x1xf32, #tpu.memory_space<vmem>>, %arg3: memref<16x16xf32, #tpu.memory_space<vmem>>, %arg4: memref<3x16x16xf32, #tpu.memory_space<vmem>>, %arg5: memref<1x16xf32, #tpu.memory_space<vmem>>, %arg6: memref<16x48xf32, #tpu.memory_space<vmem>>, %arg7: memref<1x48xf32, #tpu.memory_space<vmem>>, %arg8: memref<16x16xf32, #tpu.memory_space<vmem>>, %arg9: memref<1x16xf32, #tpu.memory_space<vmem>>, %arg10: memref<16x16xf32, #tpu.memory_space<vmem>>, %arg11: memref<1x16xf32, #tpu.memory_space<vmem>>, %arg12: memref<1x16x16xf32, #tpu.memory_space<vmem>>) attributes {dimension_semantics = [#tpu.dimension_semantics<parallel>], iteration_bounds = array<i64: 2>, scalar_prefetch = 0 : i64, scratch_operands = 0 : i64, tpu.core_type = #tpu.core_type<tc>, window_params = [{transform_indices = @transform_0, window_bounds = array<i64: 1, 20, 16>}, {transform_indices = @transform_1, window_bounds = array<i64: 1, 16, 1>}, {pipeline_mode = #tpu.pipeline_mode<synchronous>, transform_indices = @transform_2, window_bounds = array<i64: 16, 16>}, {pipeline_mode = #tpu.pipeline_mode<synchronous>, transform_indices = @transform_3, window_bounds = array<i64: 3, 16, 16>}, {pipeline_mode = #tpu.pipeline_mode<synchronous>, transform_indices = @transform_4, window_bounds = array<i64: 1, 16>}, {pipeline_mode = #tpu.pipeline_mode<synchronous>, transform_indices = @transform_5, window_bounds = array<i64: 16, 48>}, {pipeline_mode = #tpu.pipeline_mode<synchronous>, transform_indices = @transform_6, window_bounds = array<i64: 1, 48>}, {pipeline_mode = #tpu.pipeline_mode<synchronous>, transform_indices = @transform_7, window_bounds = array<i64: 16, 16>}, {pipeline_mode = #tpu.pipeline_mode<synchronous>, transform_indices = @transform_8, window_bounds = array<i64: 1, 16>}, {pipeline_mode = #tpu.pipeline_mode<synchronous>, transform_indices = @transform_9, window_bounds = array<i64: 16, 16>}, {pipeline_mode = #tpu.pipeline_mode<synchronous>, transform_indices = @transform_10, window_bounds = array<i64: 1, 16>}, {transform_indices = @transform_11, window_bounds = array<i64: 1, 16, 16>}]} {
    %c0 = arith.constant 0 : index
    %c0_0 = arith.constant 0 : index
    %c0_1 = arith.constant 0 : index
    %0 = vector.load %arg2[%c0, %c0_0, %c0_1] : memref<1x16x1xf32, #tpu.memory_space<vmem>>, vector<1x16x1xf32>
    %1 = vector.shape_cast %0 : vector<1x16x1xf32> to vector<16x1xf32>
    %c0_2 = arith.constant 0 : index
    %c0_3 = arith.constant 0 : index
    %c0_4 = arith.constant 0 : index
    %2 = vector.load %arg1[%c0_2, %c0_3, %c0_4] : memref<1x20x16xf32, #tpu.memory_space<vmem>>, vector<1x20x16xf32>
    %3 = vector.extract_strided_slice %2 {offsets = [0, 0, 0], sizes = [1, 16, 16], strides = [1, 1, 1]} : vector<1x20x16xf32> to vector<1x16x16xf32>
    %4 = vector.shape_cast %3 : vector<1x16x16xf32> to vector<16x16xf32>
    %5 = vector.extract_strided_slice %2 {offsets = [0, 2, 0], sizes = [1, 16, 16], strides = [1, 1, 1]} : vector<1x20x16xf32> to vector<1x16x16xf32>
    %6 = vector.shape_cast %5 : vector<1x16x16xf32> to vector<16x16xf32>
    %7 = vector.extract_strided_slice %2 {offsets = [0, 4, 0], sizes = [1, 16, 16], strides = [1, 1, 1]} : vector<1x20x16xf32> to vector<1x16x16xf32>
    %8 = vector.shape_cast %7 : vector<1x16x16xf32> to vector<16x16xf32>
    %c0_5 = arith.constant 0 : index
    %c0_6 = arith.constant 0 : index
    %9 = vector.load %arg5[%c0_5, %c0_6] : memref<1x16xf32, #tpu.memory_space<vmem>>, vector<1x16xf32>
    %c0_7 = arith.constant 0 : index
    %c0_8 = arith.constant 0 : index
    %c0_9 = arith.constant 0 : index
    %10 = vector.load %arg4[%c0_7, %c0_8, %c0_9] : memref<3x16x16xf32, #tpu.memory_space<vmem>>, vector<1x16x16xf32>
    %11 = vector.shape_cast %10 : vector<1x16x16xf32> to vector<16x16xf32>
    %cst = arith.constant dense<0.000000e+00> : vector<16x16xf32>
    %12 = tpu.matmul %4, %11, %cst {dimension_numbers = #tpu.dot_dimension_numbers<[1], [0], [0], [1], [0, 0, 1, 1], [], []>} : vector<16x16xf32>, vector<16x16xf32>, vector<16x16xf32> -> vector<16x16xf32>
    %13 = vector.broadcast %9 : vector<1x16xf32> to vector<16x16xf32>
    %14 = arith.addf %13, %12 : vector<16x16xf32>
    %c1 = arith.constant 1 : index
    %c0_10 = arith.constant 0 : index
    %c0_11 = arith.constant 0 : index
    %15 = vector.load %arg4[%c1, %c0_10, %c0_11] : memref<3x16x16xf32, #tpu.memory_space<vmem>>, vector<1x16x16xf32>
    %16 = vector.shape_cast %15 : vector<1x16x16xf32> to vector<16x16xf32>
    %cst_12 = arith.constant dense<0.000000e+00> : vector<16x16xf32>
    %17 = tpu.matmul %6, %16, %cst_12 {dimension_numbers = #tpu.dot_dimension_numbers<[1], [0], [0], [1], [0, 0, 1, 1], [], []>} : vector<16x16xf32>, vector<16x16xf32>, vector<16x16xf32> -> vector<16x16xf32>
    %18 = arith.addf %14, %17 : vector<16x16xf32>
    %c2 = arith.constant 2 : index
    %c0_13 = arith.constant 0 : index
    %c0_14 = arith.constant 0 : index
    %19 = vector.load %arg4[%c2, %c0_13, %c0_14] : memref<3x16x16xf32, #tpu.memory_space<vmem>>, vector<1x16x16xf32>
    %20 = vector.shape_cast %19 : vector<1x16x16xf32> to vector<16x16xf32>
    %cst_15 = arith.constant dense<0.000000e+00> : vector<16x16xf32>
    %21 = tpu.matmul %8, %20, %cst_15 {dimension_numbers = #tpu.dot_dimension_numbers<[1], [0], [0], [1], [0, 0, 1, 1], [], []>} : vector<16x16xf32>, vector<16x16xf32>, vector<16x16xf32> -> vector<16x16xf32>
    %22 = arith.addf %18, %21 : vector<16x16xf32>
    %cst_16 = arith.constant 0.000000e+00 : f32
    %23 = vector.broadcast %cst_16 : f32 to vector<16x16xf32>
    %24 = arith.maximumf %22, %23 : vector<16x16xf32>
    %25 = vector.shape_cast %24 : vector<16x16xf32> to vector<1x16x16xf32>
    %cst_17 = arith.constant dense<0.000000e+00> : vector<1x16xf32>
    %26 = vector.multi_reduction <add>, %25, %cst_17 [1] : vector<1x16x16xf32> to vector<1x16xf32>
    %27 = vector.shape_cast %26 : vector<1x16xf32> to vector<1x1x16xf32>
    %cst_18 = arith.constant 1.600000e+01 : f32
    %28 = vector.broadcast %cst_18 : f32 to vector<1x1x16xf32>
    %29 = arith.divf %27, %28 : vector<1x1x16xf32>
    %30 = vector.broadcast %29 : vector<1x1x16xf32> to vector<1x16x16xf32>
    %31 = arith.subf %25, %30 : vector<1x16x16xf32>
    %32 = arith.mulf %31, %31 : vector<1x16x16xf32>
    %cst_19 = arith.constant dense<0.000000e+00> : vector<1x16xf32>
    %33 = vector.multi_reduction <add>, %32, %cst_19 [1] : vector<1x16x16xf32> to vector<1x16xf32>
    %34 = vector.shape_cast %33 : vector<1x16xf32> to vector<1x1x16xf32>
    %cst_20 = arith.constant 1.600000e+01 : f32
    %35 = vector.broadcast %cst_20 : f32 to vector<1x1x16xf32>
    %36 = arith.divf %34, %35 : vector<1x1x16xf32>
    %37 = vector.broadcast %29 : vector<1x1x16xf32> to vector<1x16x16xf32>
    %38 = arith.subf %25, %37 : vector<1x16x16xf32>
    %cst_21 = arith.constant 9.99999974E-6 : f32
    %39 = vector.broadcast %cst_21 : f32 to vector<1x1x16xf32>
    %40 = arith.addf %36, %39 : vector<1x1x16xf32>
    %41 = math.rsqrt %40 : vector<1x1x16xf32>
    %42 = vector.broadcast %41 : vector<1x1x16xf32> to vector<1x16x16xf32>
    %43 = arith.mulf %38, %42 : vector<1x16x16xf32>
    %44 = vector.shape_cast %43 : vector<1x16x16xf32> to vector<16x16xf32>
    %c0_22 = arith.constant 0 : index
    %c0_23 = arith.constant 0 : index
    %45 = vector.load %arg6[%c0_22, %c0_23] : memref<16x48xf32, #tpu.memory_space<vmem>>, vector<16x48xf32>
    %cst_24 = arith.constant dense<0.000000e+00> : vector<16x48xf32>
    %46 = tpu.matmul %44, %45, %cst_24 {dimension_numbers = #tpu.dot_dimension_numbers<[1], [0], [0], [1], [0, 0, 1, 1], [], []>} : vector<16x16xf32>, vector<16x48xf32>, vector<16x48xf32> -> vector<16x48xf32>
    %c0_25 = arith.constant 0 : index
    %c0_26 = arith.constant 0 : index
    %47 = vector.load %arg7[%c0_25, %c0_26] : memref<1x48xf32, #tpu.memory_space<vmem>>, vector<1x48xf32>
    %48 = vector.broadcast %47 : vector<1x48xf32> to vector<16x48xf32>
    %49 = arith.addf %46, %48 : vector<16x48xf32>
    %50 = vector.extract_strided_slice %49 {offsets = [0, 0], sizes = [16, 16], strides = [1, 1]} : vector<16x48xf32> to vector<16x16xf32>
    %51 = arith.negf %50 : vector<16x16xf32>
    %52 = math.exp %51 : vector<16x16xf32>
    %cst_27 = arith.constant 1.000000e+00 : f32
    %53 = vector.broadcast %cst_27 : f32 to vector<16x16xf32>
    %54 = arith.addf %53, %52 : vector<16x16xf32>
    %55 = arith.divf %53, %54 : vector<16x16xf32>
    %56 = vector.shape_cast %55 : vector<16x16xf32> to vector<1x16x16xf32>
    %57 = vector.extract_strided_slice %49 {offsets = [0, 16], sizes = [16, 16], strides = [1, 1]} : vector<16x48xf32> to vector<16x16xf32>
    %58 = arith.negf %57 : vector<16x16xf32>
    %59 = math.exp %58 : vector<16x16xf32>
    %cst_28 = arith.constant 1.000000e+00 : f32
    %60 = vector.broadcast %cst_28 : f32 to vector<16x16xf32>
    %61 = arith.addf %60, %59 : vector<16x16xf32>
    %62 = arith.divf %60, %61 : vector<16x16xf32>
    %63 = vector.shape_cast %62 : vector<16x16xf32> to vector<1x16x16xf32>
    %64 = vector.extract_strided_slice %49 {offsets = [0, 32], sizes = [16, 16], strides = [1, 1]} : vector<16x48xf32> to vector<16x16xf32>
    %65 = vector.shape_cast %64 : vector<16x16xf32> to vector<1x16x16xf32>
    %c0_29 = arith.constant 0 : index
    %c0_30 = arith.constant 0 : index
    %66 = vector.load %arg3[%c0_29, %c0_30] : memref<16x16xf32, #tpu.memory_space<vmem>>, vector<16x16xf32>
    "tpu.trace_start"() <{level = 10 : i32, message = "bld,ble->bde"}> : () -> ()
    %cst_31 = arith.constant dense<0.000000e+00> : vector<1x16x16xf32>
    %67 = tpu.matmul %63, %65, %cst_31 {dimension_numbers = #tpu.dot_dimension_numbers<[1], [1], [2], [2], [0, 0, 0, 2, 1, 2], [0], [0]>} : vector<1x16x16xf32>, vector<1x16x16xf32>, vector<1x16x16xf32> -> vector<1x16x16xf32>
    "tpu.trace_stop"() : () -> ()
    %68 = vector.shape_cast %66 : vector<16x16xf32> to vector<1x16x16xf32>
    %69 = arith.mulf %67, %68 : vector<1x16x16xf32>
    %cst_32 = arith.constant dense<0.000000e+00> : vector<1x16xf32>
    %70 = vector.multi_reduction <add>, %63, %cst_32 [1] : vector<1x16x16xf32> to vector<1x16xf32>
    %71 = vector.shape_cast %70 : vector<1x16xf32> to vector<1x1x16xf32>
    %cst_33 = arith.constant 9.99999997E-7 : f32
    %72 = vector.broadcast %cst_33 : f32 to vector<1x1x16xf32>
    %73 = arith.addf %71, %72 : vector<1x1x16xf32>
    %74 = vector.broadcast %73 : vector<1x1x16xf32> to vector<1x16x16xf32>
    %75 = arith.mulf %56, %74 : vector<1x16x16xf32>
    %76 = vector.shape_cast %75 : vector<1x16x16xf32> to vector<16x16xf32>
    %cst_34 = arith.constant dense<0.000000e+00> : vector<16x16xf32>
    %77 = tpu.matmul %76, %66, %cst_34 {dimension_numbers = #tpu.dot_dimension_numbers<[1], [0], [0], [1], [0, 0, 1, 1], [], []>} : vector<16x16xf32>, vector<16x16xf32>, vector<16x16xf32> -> vector<16x16xf32>
    %78 = tpu.reciprocal %77 {approx = true} : vector<16x16xf32> -> vector<16x16xf32>
    %79 = arith.mulf %77, %78 : vector<16x16xf32>
    %cst_35 = arith.constant 2.000000e+00 : f32
    %80 = vector.broadcast %cst_35 : f32 to vector<16x16xf32>
    %81 = arith.subf %80, %79 : vector<16x16xf32>
    %82 = arith.mulf %78, %81 : vector<16x16xf32>
    "tpu.trace_start"() <{level = 10 : i32, message = "bld,bde->ble"}> : () -> ()
    %cst_36 = arith.constant dense<0.000000e+00> : vector<1x16x16xf32>
    %83 = tpu.matmul %56, %69, %cst_36 {dimension_numbers = #tpu.dot_dimension_numbers<[2], [1], [1], [2], [0, 0, 0, 1, 1, 2], [0], [0]>} : vector<1x16x16xf32>, vector<1x16x16xf32>, vector<1x16x16xf32> -> vector<1x16x16xf32>
    "tpu.trace_stop"() : () -> ()
    %84 = vector.shape_cast %83 : vector<1x16x16xf32> to vector<16x16xf32>
    %85 = arith.mulf %84, %82 : vector<16x16xf32>
    %c0_37 = arith.constant 0 : index
    %c0_38 = arith.constant 0 : index
    %86 = vector.load %arg8[%c0_37, %c0_38] : memref<16x16xf32, #tpu.memory_space<vmem>>, vector<16x16xf32>
    %cst_39 = arith.constant dense<0.000000e+00> : vector<16x16xf32>
    %87 = tpu.matmul %85, %86, %cst_39 {dimension_numbers = #tpu.dot_dimension_numbers<[1], [0], [0], [1], [0, 0, 1, 1], [], []>} : vector<16x16xf32>, vector<16x16xf32>, vector<16x16xf32> -> vector<16x16xf32>
    %c0_40 = arith.constant 0 : index
    %c0_41 = arith.constant 0 : index
    %88 = vector.load %arg9[%c0_40, %c0_41] : memref<1x16xf32, #tpu.memory_space<vmem>>, vector<1x16xf32>
    %89 = vector.broadcast %88 : vector<1x16xf32> to vector<16x16xf32>
    %90 = arith.addf %87, %89 : vector<16x16xf32>
    %91 = vector.broadcast %1 : vector<16x1xf32> to vector<16x16xf32>
    %92 = arith.mulf %90, %91 : vector<16x16xf32>
    %cst_42 = arith.constant 0.699999988 : f32
    %93 = vector.broadcast %cst_42 : f32 to vector<16x16xf32>
    %94 = arith.mulf %93, %92 : vector<16x16xf32>
    %95 = arith.addf %94, %24 : vector<16x16xf32>
    %c0_43 = arith.constant 0 : index
    %c0_44 = arith.constant 0 : index
    %96 = vector.load %arg10[%c0_43, %c0_44] : memref<16x16xf32, #tpu.memory_space<vmem>>, vector<16x16xf32>
    %cst_45 = arith.constant dense<0.000000e+00> : vector<16x16xf32>
    %97 = tpu.matmul %95, %96, %cst_45 {dimension_numbers = #tpu.dot_dimension_numbers<[1], [0], [0], [1], [0, 0, 1, 1], [], []>} : vector<16x16xf32>, vector<16x16xf32>, vector<16x16xf32> -> vector<16x16xf32>
    %c0_46 = arith.constant 0 : index
    %c0_47 = arith.constant 0 : index
    %98 = vector.load %arg11[%c0_46, %c0_47] : memref<1x16xf32, #tpu.memory_space<vmem>>, vector<1x16xf32>
    %99 = vector.broadcast %98 : vector<1x16xf32> to vector<16x16xf32>
    %100 = arith.addf %97, %99 : vector<16x16xf32>
    %101 = arith.addf %6, %100 : vector<16x16xf32>
    %102 = vector.broadcast %1 : vector<16x1xf32> to vector<16x16xf32>
    %103 = arith.mulf %101, %102 : vector<16x16xf32>
    %104 = vector.shape_cast %103 : vector<16x16xf32> to vector<1x16x16xf32>
    %c0_48 = arith.constant 0 : index
    %c0_49 = arith.constant 0 : index
    %c0_50 = arith.constant 0 : index
    %105 = vector.load %arg12[%c0_48, %c0_49, %c0_50] : memref<1x16x16xf32, #tpu.memory_space<vmem>>, vector<1x16x16xf32>
    tpu.vector_store %arg12[%c0_48, %c0_49, %c0_50], %104 {strides = array<i32>} : memref<1x16x16xf32, #tpu.memory_space<vmem>>, vector<1x16x16xf32>,
    return
  }
  func.func @transform_0(%arg0: i32) -> (i32, i32, i32) {
    %c0_i32 = arith.constant 0 : i32
    %c0_i32_0 = arith.constant 0 : i32
    %c0_i32_1 = arith.constant 0 : i32
    return %arg0, %c0_i32, %c0_i32_0 : i32, i32, i32
  }
  func.func @transform_1(%arg0: i32) -> (i32, i32, i32) {
    %c0_i32 = arith.constant 0 : i32
    %c0_i32_0 = arith.constant 0 : i32
    %c0_i32_1 = arith.constant 0 : i32
    return %arg0, %c0_i32, %c0_i32_0 : i32, i32, i32
  }
  func.func @transform_2(%arg0: i32) -> (i32, i32) {
    %c0_i32 = arith.constant 0 : i32
    %c0_i32_0 = arith.constant 0 : i32
    %c0_i32_1 = arith.constant 0 : i32
    return %c0_i32, %c0_i32_0 : i32, i32
  }
  func.func @transform_3(%arg0: i32) -> (i32, i32, i32) {
    %c0_i32 = arith.constant 0 : i32
    %c0_i32_0 = arith.constant 0 : i32
    %c0_i32_1 = arith.constant 0 : i32
    %c0_i32_2 = arith.constant 0 : i32
    return %c0_i32, %c0_i32_0, %c0_i32_1 : i32, i32, i32
  }
  func.func @transform_4(%arg0: i32) -> (i32, i32) {
    %c0_i32 = arith.constant 0 : i32
    %c0_i32_0 = arith.constant 0 : i32
    %c0_i32_1 = arith.constant 0 : i32
    return %c0_i32, %c0_i32_0 : i32, i32
  }
  func.func @transform_5(%arg0: i32) -> (i32, i32) {
    %c0_i32 = arith.constant 0 : i32
    %c0_i32_0 = arith.constant 0 : i32
    %c0_i32_1 = arith.constant 0 : i32
    return %c0_i32, %c0_i32_0 : i32, i32
  }
  func.func @transform_6(%arg0: i32) -> (i32, i32) {
    %c0_i32 = arith.constant 0 : i32
    %c0_i32_0 = arith.constant 0 : i32
    %c0_i32_1 = arith.constant 0 : i32
    return %c0_i32, %c0_i32_0 : i32, i32
  }
  func.func @transform_7(%arg0: i32) -> (i32, i32) {
    %c0_i32 = arith.constant 0 : i32
    %c0_i32_0 = arith.constant 0 : i32
    %c0_i32_1 = arith.constant 0 : i32
    return %c0_i32, %c0_i32_0 : i32, i32
  }
  func.func @transform_8(%arg0: i32) -> (i32, i32) {
    %c0_i32 = arith.constant 0 : i32
    %c0_i32_0 = arith.constant 0 : i32
    %c0_i32_1 = arith.constant 0 : i32
    return %c0_i32, %c0_i32_0 : i32, i32
  }
  func.func @transform_9(%arg0: i32) -> (i32, i32) {
    %c0_i32 = arith.constant 0 : i32
    %c0_i32_0 = arith.constant 0 : i32
    %c0_i32_1 = arith.constant 0 : i32
    return %c0_i32, %c0_i32_0 : i32, i32
  }
  func.func @transform_10(%arg0: i32) -> (i32, i32) {
    %c0_i32 = arith.constant 0 : i32
    %c0_i32_0 = arith.constant 0 : i32
    %c0_i32_1 = arith.constant 0 : i32
    return %c0_i32, %c0_i32_0 : i32, i32
  }
  func.func @transform_11(%arg0: i32) -> (i32, i32, i32) {
    %c0_i32 = arith.constant 0 : i32
    %c0_i32_0 = arith.constant 0 : i32
    %c0_i32_1 = arith.constant 0 : i32
    return %arg0, %c0_i32, %c0_i32_0 : i32, i32, i32
  }
}

</mosaic_0001>

<llo_original>
// kernel: linear_att_forward.1
$region0: #{linear_att_forward.1}
  #allocation0 [shape = 'u32[]', space=smem, size = 0x4, offset = 0x4, fixed_abs, tag = 'smem constant byte address 0x4 - core index']
  #allocation1 [shape = 'u32[144,128]{1,0:T(1,128)}', space=vmem, size = 0x12000, scoped, tag = 'internal scratch']
  %s0 = inlined_call_operand.vmem [shape: f32[2,20,16], index: 0, kind: input, shape index: {}]
  %s1 = inlined_call_operand.vmem [shape: f32[2,16,1], index: 1, kind: input, shape index: {}]
  %s2 = inlined_call_operand.vmem [shape: f32[16,16], index: 2, kind: input, shape index: {}]
  %s3 = inlined_call_operand.vmem [shape: f32[3,16,16], index: 3, kind: input, shape index: {}]
  %s4 = inlined_call_operand.vmem [shape: f32[1,16], index: 4, kind: input, shape index: {}]
  %s5 = inlined_call_operand.vmem [shape: f32[16,48], index: 5, kind: input, shape index: {}]
  %s6 = inlined_call_operand.vmem [shape: f32[1,48], index: 6, kind: input, shape index: {}]
  %s7 = inlined_call_operand.vmem [shape: f32[16,16], index: 7, kind: input, shape index: {}]
  %s8 = inlined_call_operand.vmem [shape: f32[1,16], index: 8, kind: input, shape index: {}]
  %s9 = inlined_call_operand.vmem [shape: f32[16,16], index: 9, kind: input, shape index: {}]
  %s10 = inlined_call_operand.vmem [shape: f32[1,16], index: 10, kind: input, shape index: {}]
  %s11 = inlined_call_operand.vmem [shape: f32[2,16,16], index: 11, kind: output, shape index: {}]
  %s12 = sld [smem:[#allocation0]]
  $region77: #{linear_att_forward.1} parent=0
    _
  %s14 = ssub.s32 1, %s12
  %s15 = scalar_select 0, %s14, %s12
  loop: start=0, step=1, limit=4
  $region2: #{linear_att_forward.1} parent=0 // loop_pre_header
    _
  $region3: #{linear_att_forward.1} parent=0 // loop_header
    %s17 = sphi 0, %s21
    %p18 = scmp.ge.s32.totalorder %s17, 4
    %s27 = sphi 0, %s29
    %s30 = sphi 0, %s27
    %s31 = sphi 0, %s30
    %s47 = sphi 0, %s31
    %s53 = sphi 0, %s55
    %s56 = sphi 0, %s53
    %s57 = sphi 0, %s56
    %s73 = sphi 0, %s57
    %s77 = sphi 0, %s77
    %s79 = sphi 0, %s77
    %s80 = sphi 0, %s79
    %s94 = sphi 0, %s80
    %s98 = sphi 0, %s98
    %s100 = sphi 0, %s98
    %s101 = sphi 0, %s100
    %s115 = sphi 0, %s101
    %s119 = sphi 0, %s119
    %s121 = sphi 0, %s119
    %s122 = sphi 0, %s121
    %s136 = sphi 0, %s122
    %s140 = sphi 0, %s140
    %s142 = sphi 0, %s140
    %s143 = sphi 0, %s142
    %s157 = sphi 0, %s143
    %s161 = sphi 0, %s161
    %s163 = sphi 0, %s161
    %s164 = sphi 0, %s163
    %s178 = sphi 0, %s164
    %s182 = sphi 0, %s182
    %s184 = sphi 0, %s182
    %s185 = sphi 0, %s184
    %s199 = sphi 0, %s185
    %s203 = sphi 0, %s203
    %s205 = sphi 0, %s203
    %s206 = sphi 0, %s205
    %s220 = sphi 0, %s206
    %s224 = sphi 0, %s224
    %s226 = sphi 0, %s224
    %s227 = sphi 0, %s226
    %s241 = sphi 0, %s227
    %s245 = sphi 0, %s245
    %s247 = sphi 0, %s245
    %s248 = sphi 0, %s247
    %s262 = sphi 0, %s248
    %s268 = sphi 0, %s270
    %s271 = sphi 0, %s268
    %s272 = sphi 0, %s271
    %s288 = sphi 0, %s272
  $region4: #{linear_att_forward.1} parent=0 // loop_header_branch
    %20 = sbr.rel (%p18) target = $region8
  $region5: #{linear_att_forward.1} parent=0 // loop_body
    %s22 = ssub.s32 %s17, 1
    %s23 = ssub.s32 %s17, 2
    %s24 = sadd.s32 %s17, 1
    %s25 = ssub.s32 %s17, %s24
    %p26 = scmp.eq.s32.totalorder %s25, 0
    %s28 = sadd.s32 %s27, 1
    %s29 = scalar_select %p26, %s27, %s28
    %p32 = pneg %p26
    %p33 = scmp.eq.s32.totalorder %s17, 1
    %p34 = por %p32, %p33
    %p35 = scmp.ne.s32.totalorder %s27, %s30
    %p36 = scmp.eq.s32.totalorder %s17, 0
    %p37 = por %p35, %p36
    %p38 = scmp.ne.s32.totalorder %s27, %s30
    %p39 = scmp.eq.s32.totalorder %s22, 1
    %p40 = por %p38, %p39
    %p41 = scmp.ne.s32.totalorder %s30, %s31
    %p42 = scmp.eq.s32.totalorder %s22, 0
    %p43 = por %p41, %p42
    %p44 = scmp.ne.s32.totalorder %s30, %s31
    %p45 = scmp.eq.s32.totalorder %s23, 1
    %p46 = por %p44, %p45
    %p48 = scmp.ne.s32.totalorder %s31, %s47
    %p49 = scmp.eq.s32.totalorder %s23, 0
    %p50 = por %p48, %p49
    %s51 = ssub.s32 %s17, %s24
    %p52 = scmp.eq.s32.totalorder %s51, 0
    %s54 = sadd.s32 %s53, 1
    %s55 = scalar_select %p52, %s53, %s54
    %p58 = pneg %p52
    %p59 = scmp.eq.s32.totalorder %s17, 1
    %p60 = por %p58, %p59
    %p61 = scmp.ne.s32.totalorder %s53, %s56
    %p62 = scmp.eq.s32.totalorder %s17, 0
    %p63 = por %p61, %p62
    %p64 = scmp.ne.s32.totalorder %s53, %s56
    %p65 = scmp.eq.s32.totalorder %s22, 1
    %p66 = por %p64, %p65
    %p67 = scmp.ne.s32.totalorder %s56, %s57
    %p68 = scmp.eq.s32.totalorder %s22, 0
    %p69 = por %p67, %p68
    %p70 = scmp.ne.s32.totalorder %s56, %s57
    %p71 = scmp.eq.s32.totalorder %s23, 1
    %p72 = por %p70, %p71
    %p74 = scmp.ne.s32.totalorder %s57, %s73
    %p75 = scmp.eq.s32.totalorder %s23, 0
    %p76 = por %p74, %p75
    %s78 = sadd.s32 %s77, 1
    %p81 = scmp.eq.s32.totalorder %s17, 1
    %p82 = scmp.ne.s32.totalorder %s77, %s79
    %p83 = scmp.eq.s32.totalorder %s17, 0
    %p84 = por %p82, %p83
    %p85 = scmp.ne.s32.totalorder %s77, %s79
    %p86 = scmp.eq.s32.totalorder %s22, 1
    %p87 = por %p85, %p86
    %p88 = scmp.ne.s32.totalorder %s79, %s80
    %p89 = scmp.eq.s32.totalorder %s22, 0
    %p90 = por %p88, %p89
    %p91 = scmp.ne.s32.totalorder %s79, %s80
    %p92 = scmp.eq.s32.totalorder %s23, 1
    %p93 = por %p91, %p92
    %p95 = scmp.ne.s32.totalorder %s80, %s94
    %p96 = scmp.eq.s32.totalorder %s23, 0
    %p97 = por %p95, %p96
    %s99 = sadd.s32 %s98, 1
    %p102 = scmp.eq.s32.totalorder %s17, 1
    %p103 = scmp.ne.s32.totalorder %s98, %s100
    %p104 = scmp.eq.s32.totalorder %s17, 0
    %p105 = por %p103, %p104
    %p106 = scmp.ne.s32.totalorder %s98, %s100
    %p107 = scmp.eq.s32.totalorder %s22, 1
    %p108 = por %p106, %p107
    %p109 = scmp.ne.s32.totalorder %s100, %s101
    %p110 = scmp.eq.s32.totalorder %s22, 0
    %p111 = por %p109, %p110
    %p112 = scmp.ne.s32.totalorder %s100, %s101
    %p113 = scmp.eq.s32.totalorder %s23, 1
    %p114 = por %p112, %p113
    %p116 = scmp.ne.s32.totalorder %s101, %s115
    %p117 = scmp.eq.s32.totalorder %s23, 0
    %p118 = por %p116, %p117
    %s120 = sadd.s32 %s119, 1
    %p123 = scmp.eq.s32.totalorder %s17, 1
    %p124 = scmp.ne.s32.totalorder %s119, %s121
    %p125 = scmp.eq.s32.totalorder %s17, 0
    %p126 = por %p124, %p125
    %p127 = scmp.ne.s32.totalorder %s119, %s121
    %p128 = scmp.eq.s32.totalorder %s22, 1
    %p129 = por %p127, %p128
    %p130 = scmp.ne.s32.totalorder %s121, %s122
    %p131 = scmp.eq.s32.totalorder %s22, 0
    %p132 = por %p130, %p131
    %p133 = scmp.ne.s32.totalorder %s121, %s122
    %p134 = scmp.eq.s32.totalorder %s23, 1
    %p135 = por %p133, %p134
    %p137 = scmp.ne.s32.totalorder %s122, %s136
    %p138 = scmp.eq.s32.totalorder %s23, 0
    %p139 = por %p137, %p138
    %s141 = sadd.s32 %s140, 1
    %p144 = scmp.eq.s32.totalorder %s17, 1
    %p145 = scmp.ne.s32.totalorder %s140, %s142
    %p146 = scmp.eq.s32.totalorder %s17, 0
    %p147 = por %p145, %p146
    %p148 = scmp.ne.s32.totalorder %s140, %s142
    %p149 = scmp.eq.s32.totalorder %s22, 1
    %p150 = por %p148, %p149
    %p151 = scmp.ne.s32.totalorder %s142, %s143
    %p152 = scmp.eq.s32.totalorder %s22, 0
    %p153 = por %p151, %p152
    %p154 = scmp.ne.s32.totalorder %s142, %s143
    %p155 = scmp.eq.s32.totalorder %s23, 1
    %p156 = por %p154, %p155
    %p158 = scmp.ne.s32.totalorder %s143, %s157
    %p159 = scmp.eq.s32.totalorder %s23, 0
    %p160 = por %p158, %p159
    %s162 = sadd.s32 %s161, 1
    %p165 = scmp.eq.s32.totalorder %s17, 1
    %p166 = scmp.ne.s32.totalorder %s161, %s163
    %p167 = scmp.eq.s32.totalorder %s17, 0
    %p168 = por %p166, %p167
    %p169 = scmp.ne.s32.totalorder %s161, %s163
    %p170 = scmp.eq.s32.totalorder %s22, 1
    %p171 = por %p169, %p170
    %p172 = scmp.ne.s32.totalorder %s163, %s164
    %p173 = scmp.eq.s32.totalorder %s22, 0
    %p174 = por %p172, %p173
    %p175 = scmp.ne.s32.totalorder %s163, %s164
    %p176 = scmp.eq.s32.totalorder %s23, 1
    %p177 = por %p175, %p176
    %p179 = scmp.ne.s32.totalorder %s164, %s178
    %p180 = scmp.eq.s32.totalorder %s23, 0
    %p181 = por %p179, %p180
    %s183 = sadd.s32 %s182, 1
    %p186 = scmp.eq.s32.totalorder %s17, 1
    %p187 = scmp.ne.s32.totalorder %s182, %s184
    %p188 = scmp.eq.s32.totalorder %s17, 0
    %p189 = por %p187, %p188
    %p190 = scmp.ne.s32.totalorder %s182, %s184
    %p191 = scmp.eq.s32.totalorder %s22, 1
    %p192 = por %p190, %p191
    %p193 = scmp.ne.s32.totalorder %s184, %s185
    %p194 = scmp.eq.s32.totalorder %s22, 0
    %p195 = por %p193, %p194
    %p196 = scmp.ne.s32.totalorder %s184, %s185
    %p197 = scmp.eq.s32.totalorder %s23, 1
    %p198 = por %p196, %p197
    %p200 = scmp.ne.s32.totalorder %s185, %s199
    %p201 = scmp.eq.s32.totalorder %s23, 0
    %p202 = por %p200, %p201
    %s204 = sadd.s32 %s203, 1
    %p207 = scmp.eq.s32.totalorder %s17, 1
    %p208 = scmp.ne.s32.totalorder %s203, %s205
    %p209 = scmp.eq.s32.totalorder %s17, 0
    %p210 = por %p208, %p209
    %p211 = scmp.ne.s32.totalorder %s203, %s205
    %p212 = scmp.eq.s32.totalorder %s22, 1
    %p213 = por %p211, %p212
    %p214 = scmp.ne.s32.totalorder %s205, %s206
    %p215 = scmp.eq.s32.totalorder %s22, 0
    %p216 = por %p214, %p215
    %p217 = scmp.ne.s32.totalorder %s205, %s206
    %p218 = scmp.eq.s32.totalorder %s23, 1
    %p219 = por %p217, %p218
    %p221 = scmp.ne.s32.totalorder %s206, %s220
    %p222 = scmp.eq.s32.totalorder %s23, 0
    %p223 = por %p221, %p222
    %s225 = sadd.s32 %s224, 1
    %p228 = scmp.eq.s32.totalorder %s17, 1
    %p229 = scmp.ne.s32.totalorder %s224, %s226
    %p230 = scmp.eq.s32.totalorder %s17, 0
    %p231 = por %p229, %p230
    %p232 = scmp.ne.s32.totalorder %s224, %s226
    %p233 = scmp.eq.s32.totalorder %s22, 1
    %p234 = por %p232, %p233
    %p235 = scmp.ne.s32.totalorder %s226, %s227
    %p236 = scmp.eq.s32.totalorder %s22, 0
    %p237 = por %p235, %p236
    %p238 = scmp.ne.s32.totalorder %s226, %s227
    %p239 = scmp.eq.s32.totalorder %s23, 1
    %p240 = por %p238, %p239
    %p242 = scmp.ne.s32.totalorder %s227, %s241
    %p243 = scmp.eq.s32.totalorder %s23, 0
    %p244 = por %p242, %p243
    %s246 = sadd.s32 %s245, 1
    %p249 = scmp.eq.s32.totalorder %s17, 1
    %p250 = scmp.ne.s32.totalorder %s245, %s247
    %p251 = scmp.eq.s32.totalorder %s17, 0
    %p252 = por %p250, %p251
    %p253 = scmp.ne.s32.totalorder %s245, %s247
    %p254 = scmp.eq.s32.totalorder %s22, 1
    %p255 = por %p253, %p254
    %p256 = scmp.ne.s32.totalorder %s247, %s248
    %p257 = scmp.eq.s32.totalorder %s22, 0
    %p258 = por %p256, %p257
    %p259 = scmp.ne.s32.totalorder %s247, %s248
    %p260 = scmp.eq.s32.totalorder %s23, 1
    %p261 = por %p259, %p260
    %p263 = scmp.ne.s32.totalorder %s248, %s262
    %p264 = scmp.eq.s32.totalorder %s23, 0
    %p265 = por %p263, %p264
    %s266 = ssub.s32 %s17, %s24
    %p267 = scmp.eq.s32.totalorder %s266, 0
    %s269 = sadd.s32 %s268, 1
    %s270 = scalar_select %p267, %s268, %s269
    %p273 = pneg %p267
    %p274 = scmp.eq.s32.totalorder %s17, 1
    %p275 = por %p273, %p274
    %p276 = scmp.ne.s32.totalorder %s268, %s271
    %p277 = scmp.eq.s32.totalorder %s17, 0
    %p278 = por %p276, %p277
    %p279 = scmp.ne.s32.totalorder %s268, %s271
    %p280 = scmp.eq.s32.totalorder %s22, 1
    %p281 = por %p279, %p280
    %p282 = scmp.ne.s32.totalorder %s271, %s272
    %p283 = scmp.eq.s32.totalorder %s22, 0
    %p284 = por %p282, %p283
    %p285 = scmp.ne.s32.totalorder %s271, %s272
    %p286 = scmp.eq.s32.totalorder %s23, 1
    %p287 = por %p285, %p286
    %p289 = scmp.ne.s32.totalorder %s272, %s288
    %p290 = scmp.eq.s32.totalorder %s23, 0
    %p291 = por %p289, %p290
    %p292 = scmp.le.s32.totalorder 1, %s17
    %p293 = scmp.lt.s32.totalorder %s17, 3
    %p294 = pnand %p292, %p293
    %p295 = pneg %p294
    // Predicated region
    $region9: #{linear_att_forward.1} parent=5 // pred_check
      _
    $region10: #{linear_att_forward.1} parent=5 // pred_check_branch
      %297 = sbr.rel (%p294) target = $region12
    $region11: #{linear_att_forward.1} parent=5 // pred_region
      %s298 = ssub.s32 %s17, 1
      // Predicated region
      $region13: #{linear_att_forward.1} parent=11 // pred_check
        %p299 = pneg %p90
      $region14: #{linear_att_forward.1} parent=11 // pred_check_branch
        %301 = sbr.rel (%p299) target = $region16
      $region15: #{linear_att_forward.1} parent=11 // pred_region
        _
      $region16: #{linear_att_forward.1} parent=11 // pred_fallthru
        _
      // Predicated region
      $region17: #{linear_att_forward.1} parent=11 // pred_check
        %p302 = pneg %p111
      $region18: #{linear_att_forward.1} parent=11 // pred_check_branch
        %304 = sbr.rel (%p302) target = $region20
      $region19: #{linear_att_forward.1} parent=11 // pred_region
        _
      $region20: #{linear_att_forward.1} parent=11 // pred_fallthru
        _
      // Predicated region
      $region21: #{linear_att_forward.1} parent=11 // pred_check
        %p305 = pneg %p132
      $region22: #{linear_att_forward.1} parent=11 // pred_check_branch
        %307 = sbr.rel (%p305) target = $region24
      $region23: #{linear_att_forward.1} parent=11 // pred_region
        _
      $region24: #{linear_att_forward.1} parent=11 // pred_fallthru
        _
      // Predicated region
      $region25: #{linear_att_forward.1} parent=11 // pred_check
        %p308 = pneg %p153
      $region26: #{linear_att_forward.1} parent=11 // pred_check_branch
        %310 = sbr.rel (%p308) target = $region28
      $region27: #{linear_att_forward.1} parent=11 // pred_region
        _
      $region28: #{linear_att_forward.1} parent=11 // pred_fallthru
        _
      // Predicated region
      $region29: #{linear_att_forward.1} parent=11 // pred_check
        %p311 = pneg %p174
      $region30: #{linear_att_forward.1} parent=11 // pred_check_branch
        %313 = sbr.rel (%p311) target = $region32
      $region31: #{linear_att_forward.1} parent=11 // pred_region
        _
      $region32: #{linear_att_forward.1} parent=11 // pred_fallthru
        _
      // Predicated region
      $region33: #{linear_att_forward.1} parent=11 // pred_check
        %p314 = pneg %p195
      $region34: #{linear_att_forward.1} parent=11 // pred_check_branch
        %316 = sbr.rel (%p314) target = $region36
      $region35: #{linear_att_forward.1} parent=11 // pred_region
        _
      $region36: #{linear_att_forward.1} parent=11 // pred_fallthru
        _
      // Predicated region
      $region37: #{linear_att_forward.1} parent=11 // pred_check
        %p317 = pneg %p216
      $region38: #{linear_att_forward.1} parent=11 // pred_check_branch
        %319 = sbr.rel (%p317) target = $region40
      $region39: #{linear_att_forward.1} parent=11 // pred_region
        _
      $region40: #{linear_att_forward.1} parent=11 // pred_fallthru
        _
      // Predicated region
      $region41: #{linear_att_forward.1} parent=11 // pred_check
        %p320 = pneg %p237
      $region42: #{linear_att_forward.1} parent=11 // pred_check_branch
        %322 = sbr.rel (%p320) target = $region44
      $region43: #{linear_att_forward.1} parent=11 // pred_region
        _
      $region44: #{linear_att_forward.1} parent=11 // pred_fallthru
        _
      // Predicated region
      $region45: #{linear_att_forward.1} parent=11 // pred_check
        %p323 = pneg %p258
      $region46: #{linear_att_forward.1} parent=11 // pred_check_branch
        %325 = sbr.rel (%p323) target = $region48
      $region47: #{linear_att_forward.1} parent=11 // pred_region
        _
      $region48: #{linear_att_forward.1} parent=11 // pred_fallthru
        _
    $region12: #{linear_att_forward.1} parent=5 // pred_fallthru
      _
    %p326 = scmp.lt.s32.totalorder %s17, 2
    // Predicated region
    $region49: #{linear_att_forward.1} parent=5 // pred_check
      %p327 = pneg %p326
    $region50: #{linear_att_forward.1} parent=5 // pred_check_branch
      %329 = sbr.rel (%p327) target = $region52
    $region51: #{linear_att_forward.1} parent=5 // pred_region
      // Predicated region
      $region53: #{linear_att_forward.1} parent=51 // pred_check
        %p330 = pneg %p37
      $region54: #{linear_att_forward.1} parent=51 // pred_check_branch
        %332 = sbr.rel (%p330) target = $region56
      $region55: #{linear_att_forward.1} parent=51 // pred_region
        %p333 = scmp.lt.s32.totalorder %s17, 1
        %s334 = scalar_select %p333, %s17, 1
        %s335 = smul.addr %s334, 3
        %s336 = smul.addr %s335, 8
        %s337 = scalar_lea.vmem %s0, %s336
      $region56: #{linear_att_forward.1} parent=51 // pred_fallthru
        _
      // Predicated region
      $region57: #{linear_att_forward.1} parent=51 // pred_check
        %p338 = pneg %p63
      $region58: #{linear_att_forward.1} parent=51 // pred_check_branch
        %340 = sbr.rel (%p338) target = $region60
      $region59: #{linear_att_forward.1} parent=51 // pred_region
        %p341 = scmp.lt.s32.totalorder %s17, 1
        %s342 = scalar_select %p341, %s17, 1
        %s343 = smul.addr %s342, 2
        %s344 = smul.addr %s343, 8
        %s345 = scalar_lea.vmem %s1, %s344
      $region60: #{linear_att_forward.1} parent=51 // pred_fallthru
        _
    $region52: #{linear_att_forward.1} parent=5 // pred_fallthru
      _
    %p346 = scmp.le.s32.totalorder 1, %s17
    %p347 = scmp.lt.s32.totalorder %s17, 3
    %p348 = pnand %p346, %p347
    %p349 = pneg %p348
    // Predicated region
    $region61: #{linear_att_forward.1} parent=5 // pred_check
      _
    $region62: #{linear_att_forward.1} parent=5 // pred_check_branch
      %351 = sbr.rel (%p348) target = $region64
    $region63: #{linear_att_forward.1} parent=5 // pred_region
      %s352 = ssub.s32 %s17, 1
      %p353 = scmp.lt.s32.totalorder %s22, 1
      %s354 = scalar_select %p353, %s22, 1
      %s355 = smul.addr %s354, 3
      %s356 = smul.addr %s355, 8
      %s357 = scalar_lea.vmem %s0, %s356
      %p358 = pneg %p43
      %p359 = pneg %p40
      %p360 = scmp.lt.s32.totalorder %s22, 1
      %s361 = scalar_select %p360, %s22, 1
      %s362 = smul.addr %s361, 2
      %s363 = smul.addr %s362, 8
      %s364 = scalar_lea.vmem %s1, %s363
      %p365 = pneg %p69
      %p366 = pneg %p66
      %p367 = pneg %p90
      %p368 = pneg %p87
      %p369 = pneg %p111
      %p370 = pneg %p108
      %p371 = pneg %p132
      %p372 = pneg %p129
      %p373 = pneg %p153
      %p374 = pneg %p150
      %p375 = pneg %p174
      %p376 = pneg %p171
      %p377 = pneg %p195
      %p378 = pneg %p192
      %p379 = pneg %p216
      %p380 = pneg %p213
      %p381 = pneg %p237
      %p382 = pneg %p234
      %p383 = pneg %p258
      %p384 = pneg %p255
      %p385 = pneg %p284
      %p386 = pneg %p281
      %p387 = scmp.lt.s32.totalorder %s22, 1
      %s388 = scalar_select %p387, %s22, 1
      %s389 = smul.addr %s388, 2
      %s390 = smul.addr %s389, 8
      %s391 = scalar_lea.vmem %s11, %s390
      %p392 = scmp.lt.s32.totalorder %s22, 1
      %s393 = scalar_select %p392, %s22, 1
      %s394 = smul.addr %s393, 3
      %s395 = smul.addr %s394, 8
      %s396 = scalar_lea.vmem %s0, %s395
      %p397 = scmp.lt.s32.totalorder %s22, 1
      %s398 = scalar_select %p397, %s22, 1
      %s399 = smul.addr %s398, 2
      %s400 = smul.addr %s399, 8
      %s401 = scalar_lea.vmem %s1, %s400
      %p402 = scmp.lt.s32.totalorder %s22, 1
      %s403 = scalar_select %p402, %s22, 1
      %s404 = smul.addr %s403, 2
      %s405 = smul.addr %s404, 8
      %s406 = scalar_lea.vmem %s11, %s405
      %v407 = vld [vmem:[%s401] sm:$0xff]
      %v408 = vld [vmem:[%s401 + $0x8] sm:$0xff]
      %v409 = vld [vmem:[%s396] sm:$0xff]
      %v410 = vld [vmem:[%s396 + $0x8] sm:$0xff]
      %v411 = vld [vmem:[%s396 + $0x10] sm:$0xf]
      %v412 = vld [vmem:[%s4] sm:$0x1]
      %v413 = vld [vmem:[%s3] sm:$0xff]
      %v414 = vld [vmem:[%s3 + $0x8] sm:$0xff]
      %vm415 = vcmask 130048
      %v417 = vsel %vm415, %v409, 0
      %v420 = vsel %vm415, %v410, 0
      %422 = vmatprep.subr.mxu0 0.0
      %423 = vmatpush1.msra.mxu0 0.0
      %424 = vmatprep.subr.mxu0 0.0
      %425 = vmatpush1.msra.mxu0 0.0
      %426 = vmatprep.subr.mxu0 0.0
      %427 = vmatpush1.msra.mxu0 0.0
      %428 = vmatprep.subr.mxu0 0.0
      %429 = vmatpush1.msra.mxu0 0.0
      %430 = vmatprep.subr.mxu0 0.0
      %431 = vmatpush1.msra.mxu0 0.0
      %432 = vmatprep.subr.mxu0 0.0
      %433 = vmatpush1.msra.mxu0 0.0
      %434 = vmatprep.subr.mxu0 0.0
      %435 = vmatpush1.msra.mxu0 0.0
      %436 = vmatprep.subr.mxu0 0.0
      %437 = vmatpush1.msra.mxu0 0.0
      %438 = vmatprep.subr.mxu0 0.0
      %439 = vmatpush1.msra.mxu0 0.0
      %440 = vmatprep.subr.mxu0 0.0
      %441 = vmatpush1.msra.mxu0 0.0
      %442 = vmatprep.subr.mxu0 0.0
      %443 = vmatpush1.msra.mxu0 0.0
      %444 = vmatprep.subr.mxu0 0.0
      %445 = vmatpush1.msra.mxu0 0.0
      %446 = vmatprep.subr.mxu0 0.0
      %447 = vmatpush1.msra.mxu0 0.0
      %448 = vmatprep.subr.mxu0 0.0
      %449 = vmatpush1.msra.mxu0 0.0
      %450 = vmatprep.subr.mxu0 0.0
      %451 = vmatpush1.msra.mxu0 %v414
      %452 = vmatprep.subr.mxu0 0.0
      %453 = vmatpush1.msra.mxu0 %v413
      %454 = vmatprep.subr.mxu0 0.0
      %455 = vmatpush2.msra.mxu0 0.0
      %456 = vmatprep.subr.mxu0 0.0
      %457 = vmatpush2.msra.mxu0 0.0
      %458 = vmatprep.subr.mxu0 0.0
      %459 = vmatpush2.msra.mxu0 0.0
      %460 = vmatprep.subr.mxu0 0.0
      %461 = vmatpush2.msra.mxu0 0.0
      %462 = vmatprep.subr.mxu0 0.0
      %463 = vmatpush2.msra.mxu0 0.0
      %464 = vmatprep.subr.mxu0 0.0
      %465 = vmatpush2.msra.mxu0 0.0
      %466 = vmatprep.subr.mxu0 0.0
      %467 = vmatpush2.msra.mxu0 0.0
      %468 = vmatprep.subr.mxu0 0.0
      %469 = vmatpush2.msra.mxu0 0.0
      %470 = vmatprep.subr.mxu0 0.0
      %471 = vmatpush2.msra.mxu0 0.0
      %472 = vmatprep.subr.mxu0 0.0
      %473 = vmatpush2.msra.mxu0 0.0
      %474 = vmatprep.subr.mxu0 0.0
      %475 = vmatpush2.msra.mxu0 0.0
      %476 = vmatprep.subr.mxu0 0.0
      %477 = vmatpush2.msra.mxu0 0.0
      %478 = vmatprep.subr.mxu0 0.0
      %479 = vmatpush2.msra.mxu0 0.0
      %480 = vmatprep.subr.mxu0 0.0
      %481 = vmatpush2.msra.mxu0 0.0
      %482 = vmatprep.subr.mxu0 0.0
      %483 = vmatpush2.msra.mxu0 0.0
      %484 = vmatprep.subr.mxu0 0.0
      %485 = vmatpush2.msra.mxu0 0.0
      %486 = vmatprep.mubr.f32.mxu0 0.0
      %487 = vmatmul.mubr.f32.gmra.mxu0 %v417
      %v488 = vpop.f32.mrf.mxu0
      %v489 = vadd.f32 0.0, %v488
      %v490 = vpop.f32.mrf.mxu0
      %491 = vmatprep.mubr.f32.mxu0 0.0
      %492 = vmatmul.mubr.f32.gmra.mxu0 %v420
      %v493 = vpop.f32.mrf.mxu0
      %v494 = vadd.f32 0.0, %v493
      %v495 = vpop.f32.mrf.mxu0
      %496 = vdwg.mxu0
      %v498 = vlaneseq
      %v499 = vshrl.u32 %v498, 7
      %v500 = vsub.s32 0, %v499
      %v501 = vrot.slane %v412, %v500
      %v503 = vadd.f32 %v501, %v489
      %v504 = vadd.f32 %v501, %v494
      %s505 = scalar_lea.vmem %s3, 16
      %v506 = vld [vmem:[%s505] sm:$0xff]
      %v507 = vld [vmem:[%s505 + $0x8] sm:$0xff]
      %vm509 = vcmask 1045504
      %v510 = vrot.slane %v409, 2
      %v511 = vrot.slane %v410, 2
      %v512 = vsel %vm509, %v510, %v511
      %v513 = vrot.slane %v411, 2
      %v514 = vsel %vm509, %v511, %v513
      %v515 = vsel %vm415, %v512, 0
      %v517 = vsel %vm415, %v514, 0
      %519 = vmatprep.subr.mxu0 0.0
      %520 = vmatpush1.msra.mxu0 0.0
      %521 = vmatprep.subr.mxu0 0.0
      %522 = vmatpush1.msra.mxu0 0.0
      %523 = vmatprep.subr.mxu0 0.0
      %524 = vmatpush1.msra.mxu0 0.0
      %525 = vmatprep.subr.mxu0 0.0
      %526 = vmatpush1.msra.mxu0 0.0
      %527 = vmatprep.subr.mxu0 0.0
      %528 = vmatpush1.msra.mxu0 0.0
      %529 = vmatprep.subr.mxu0 0.0
      %530 = vmatpush1.msra.mxu0 0.0
      %531 = vmatprep.subr.mxu0 0.0
      %532 = vmatpush1.msra.mxu0 0.0
      %533 = vmatprep.subr.mxu0 0.0
      %534 = vmatpush1.msra.mxu0 0.0
      %535 = vmatprep.subr.mxu0 0.0
      %536 = vmatpush1.msra.mxu0 0.0
      %537 = vmatprep.subr.mxu0 0.0
      %538 = vmatpush1.msra.mxu0 0.0
      %539 = vmatprep.subr.mxu0 0.0
      %540 = vmatpush1.msra.mxu0 0.0
      %541 = vmatprep.subr.mxu0 0.0
      %542 = vmatpush1.msra.mxu0 0.0
      %543 = vmatprep.subr.mxu0 0.0
      %544 = vmatpush1.msra.mxu0 0.0
      %545 = vmatprep.subr.mxu0 0.0
      %546 = vmatpush1.msra.mxu0 0.0
      %547 = vmatprep.subr.mxu0 0.0
      %548 = vmatpush1.msra.mxu0 %v507
      %549 = vmatprep.subr.mxu0 0.0
      %550 = vmatpush1.msra.mxu0 %v506
      %551 = vmatprep.subr.mxu0 0.0
      %552 = vmatpush2.msra.mxu0 0.0
      %553 = vmatprep.subr.mxu0 0.0
      %554 = vmatpush2.msra.mxu0 0.0
      %555 = vmatprep.subr.mxu0 0.0
      %556 = vmatpush2.msra.mxu0 0.0
      %557 = vmatprep.subr.mxu0 0.0
      %558 = vmatpush2.msra.mxu0 0.0
      %559 = vmatprep.subr.mxu0 0.0
      %560 = vmatpush2.msra.mxu0 0.0
      %561 = vmatprep.subr.mxu0 0.0
      %562 = vmatpush2.msra.mxu0 0.0
      %563 = vmatprep.subr.mxu0 0.0
      %564 = vmatpush2.msra.mxu0 0.0
      %565 = vmatprep.subr.mxu0 0.0
      %566 = vmatpush2.msra.mxu0 0.0
      %567 = vmatprep.subr.mxu0 0.0
      %568 = vmatpush2.msra.mxu0 0.0
      %569 = vmatprep.subr.mxu0 0.0
      %570 = vmatpush2.msra.mxu0 0.0
      %571 = vmatprep.subr.mxu0 0.0
      %572 = vmatpush2.msra.mxu0 0.0
      %573 = vmatprep.subr.mxu0 0.0
      %574 = vmatpush2.msra.mxu0 0.0
      %575 = vmatprep.subr.mxu0 0.0
      %576 = vmatpush2.msra.mxu0 0.0
      %577 = vmatprep.subr.mxu0 0.0
      %578 = vmatpush2.msra.mxu0 0.0
      %579 = vmatprep.subr.mxu0 0.0
      %580 = vmatpush2.msra.mxu0 0.0
      %581 = vmatprep.subr.mxu0 0.0
      %582 = vmatpush2.msra.mxu0 0.0
      %583 = vmatprep.mubr.f32.mxu0 0.0
      %584 = vmatmul.mubr.f32.gmra.mxu0 %v515
      %v585 = vpop.f32.mrf.mxu0
      %v586 = vadd.f32 0.0, %v585
      %v587 = vpop.f32.mrf.mxu0
      %588 = vmatprep.mubr.f32.mxu0 0.0
      %589 = vmatmul.mubr.f32.gmra.mxu0 %v517
      %v590 = vpop.f32.mrf.mxu0
      %v591 = vadd.f32 0.0, %v590
      %v592 = vpop.f32.mrf.mxu0
      %593 = vdwg.mxu0
      %v594 = vadd.f32 %v503, %v586
      %v595 = vadd.f32 %v504, %v591
      %s596 = scalar_lea.vmem %s3, 32
      %v597 = vld [vmem:[%s596] sm:$0xff]
      %v598 = vld [vmem:[%s596 + $0x8] sm:$0xff]
      %vm599 = vcmask 1043456
      %v600 = vrot.slane %v409, 4
      %v601 = vrot.slane %v410, 4
      %v602 = vsel %vm599, %v600, %v601
      %v603 = vrot.slane %v411, 4
      %v604 = vsel %vm599, %v601, %v603
      %v605 = vsel %vm415, %v602, 0
      %v607 = vsel %vm415, %v604, 0
      %609 = vmatprep.subr.mxu0 0.0
      %610 = vmatpush1.msra.mxu0 0.0
      %611 = vmatprep.subr.mxu0 0.0
      %612 = vmatpush1.msra.mxu0 0.0
      %613 = vmatprep.subr.mxu0 0.0
      %614 = vmatpush1.msra.mxu0 0.0
      %615 = vmatprep.subr.mxu0 0.0
      %616 = vmatpush1.msra.mxu0 0.0
      %617 = vmatprep.subr.mxu0 0.0
      %618 = vmatpush1.msra.mxu0 0.0
      %619 = vmatprep.subr.mxu0 0.0
      %620 = vmatpush1.msra.mxu0 0.0
      %621 = vmatprep.subr.mxu0 0.0
      %622 = vmatpush1.msra.mxu0 0.0
      %623 = vmatprep.subr.mxu0 0.0
      %624 = vmatpush1.msra.mxu0 0.0
      %625 = vmatprep.subr.mxu0 0.0
      %626 = vmatpush1.msra.mxu0 0.0
      %627 = vmatprep.subr.mxu0 0.0
      %628 = vmatpush1.msra.mxu0 0.0
      %629 = vmatprep.subr.mxu0 0.0
      %630 = vmatpush1.msra.mxu0 0.0
      %631 = vmatprep.subr.mxu0 0.0
      %632 = vmatpush1.msra.mxu0 0.0
      %633 = vmatprep.subr.mxu0 0.0
      %634 = vmatpush1.msra.mxu0 0.0
      %635 = vmatprep.subr.mxu0 0.0
      %636 = vmatpush1.msra.mxu0 0.0
      %637 = vmatprep.subr.mxu0 0.0
      %638 = vmatpush1.msra.mxu0 %v598
      %639 = vmatprep.subr.mxu0 0.0
      %640 = vmatpush1.msra.mxu0 %v597
      %641 = vmatprep.subr.mxu0 0.0
      %642 = vmatpush2.msra.mxu0 0.0
      %643 = vmatprep.subr.mxu0 0.0
      %644 = vmatpush2.msra.mxu0 0.0
      %645 = vmatprep.subr.mxu0 0.0
      %646 = vmatpush2.msra.mxu0 0.0
      %647 = vmatprep.subr.mxu0 0.0
      %648 = vmatpush2.msra.mxu0 0.0
      %649 = vmatprep.subr.mxu0 0.0
      %650 = vmatpush2.msra.mxu0 0.0
      %651 = vmatprep.subr.mxu0 0.0
      %652 = vmatpush2.msra.mxu0 0.0
      %653 = vmatprep.subr.mxu0 0.0
      %654 = vmatpush2.msra.mxu0 0.0
      %655 = vmatprep.subr.mxu0 0.0
      %656 = vmatpush2.msra.mxu0 0.0
      %657 = vmatprep.subr.mxu0 0.0
      %658 = vmatpush2.msra.mxu0 0.0
      %659 = vmatprep.subr.mxu0 0.0
      %660 = vmatpush2.msra.mxu0 0.0
      %661 = vmatprep.subr.mxu0 0.0
      %662 = vmatpush2.msra.mxu0 0.0
      %663 = vmatprep.subr.mxu0 0.0
      %664 = vmatpush2.msra.mxu0 0.0
      %665 = vmatprep.subr.mxu0 0.0
      %666 = vmatpush2.msra.mxu0 0.0
      %667 = vmatprep.subr.mxu0 0.0
      %668 = vmatpush2.msra.mxu0 0.0
      %669 = vmatprep.subr.mxu0 0.0
      %670 = vmatpush2.msra.mxu0 0.0
      %671 = vmatprep.subr.mxu0 0.0
      %672 = vmatpush2.msra.mxu0 0.0
      %673 = vmatprep.mubr.f32.mxu0 0.0
      %674 = vmatmul.mubr.f32.gmra.mxu0 %v605
      %v675 = vpop.f32.mrf.mxu0
      %v676 = vadd.f32 0.0, %v675
      %v677 = vpop.f32.mrf.mxu0
      %678 = vmatprep.mubr.f32.mxu0 0.0
      %679 = vmatmul.mubr.f32.gmra.mxu0 %v607
      %v680 = vpop.f32.mrf.mxu0
      %v681 = vadd.f32 0.0, %v680
      %v682 = vpop.f32.mrf.mxu0
      %683 = vdwg.mxu0
      %v684 = vadd.f32 %v594, %v676
      %v685 = vadd.f32 %v595, %v681
      %v686 = vmax.f32 %v684, 0.0
      %v687 = vmax.f32 %v685, 0.0
      %v688 = vsel %vm415, %v686, 0.0
      %v689 = vsel %vm415, %v687, 0.0
      %v690 = vadd.f32 %v688, %v689
      %v691 = vrot.slane %v690, 4
      %v692 = vadd.f32 %v690, %v691
      %v693 = vrot.slane %v692, 2
      %v694 = vadd.f32 %v692, %v693
      %v695 = vrot.slane %v694, 1
      %v696 = vadd.f32 %v694, %v695
      %v697 = vrcp.pop 16.0
      %v698 = vmul.f32 %v696, %v697
      %v699 = vsub.f32 %v686, %v698
      %v700 = vsub.f32 %v687, %v698
      %v701 = vmul.f32 %v699, %v699
      %v702 = vmul.f32 %v700, %v700
      %v703 = vsel %vm415, %v701, 0.0
      %v704 = vsel %vm415, %v702, 0.0
      %v705 = vadd.f32 %v703, %v704
      %v706 = vrot.slane %v705, 4
      %v707 = vadd.f32 %v705, %v706
      %v708 = vrot.slane %v707, 2
      %v709 = vadd.f32 %v707, %v708
      %v710 = vrot.slane %v709, 1
      %v711 = vadd.f32 %v709, %v710
      %v712 = vmul.f32 %v711, %v697
      %v713 = vadd.f32 %v712, 1e-05
      %v714 = vrsqrt.pop %v713
      %v715 = vmul.f32 %v699, %v714
      %v716 = vmul.f32 %v700, %v714
      %v717 = vld [vmem:[%s5] sm:$0xff]
      %v718 = vld [vmem:[%s5 + $0x8] sm:$0xff]
      %v719 = vld [vmem:[%s6] sm:$0x1]
      %v721 = vlaneseq
      %v722 = vshrl.u32 %v721, 7
      %v723 = vsub.s32 0, %v722
      %v724 = vrot.slane %v719, %v723
      %v727 = vsel %vm415, %v715, 0
      %v730 = vsel %vm415, %v716, 0
      %732 = vmatprep.subr.mxu0 0.0
      %733 = vmatpush1.msra.mxu0 0.0
      %734 = vmatprep.subr.mxu0 0.0
      %735 = vmatpush1.msra.mxu0 0.0
      %736 = vmatprep.subr.mxu0 0.0
      %737 = vmatpush1.msra.mxu0 0.0
      %738 = vmatprep.subr.mxu0 0.0
      %739 = vmatpush1.msra.mxu0 0.0
      %740 = vmatprep.subr.mxu0 0.0
      %741 = vmatpush1.msra.mxu0 0.0
      %742 = vmatprep.subr.mxu0 0.0
      %743 = vmatpush1.msra.mxu0 0.0
      %744 = vmatprep.subr.mxu0 0.0
      %745 = vmatpush1.msra.mxu0 0.0
      %746 = vmatprep.subr.mxu0 0.0
      %747 = vmatpush1.msra.mxu0 0.0
      %748 = vmatprep.subr.mxu0 0.0
      %749 = vmatpush1.msra.mxu0 0.0
      %750 = vmatprep.subr.mxu0 0.0
      %751 = vmatpush1.msra.mxu0 0.0
      %752 = vmatprep.subr.mxu0 0.0
      %753 = vmatpush1.msra.mxu0 0.0
      %754 = vmatprep.subr.mxu0 0.0
      %755 = vmatpush1.msra.mxu0 0.0
      %756 = vmatprep.subr.mxu0 0.0
      %757 = vmatpush1.msra.mxu0 0.0
      %758 = vmatprep.subr.mxu0 0.0
      %759 = vmatpush1.msra.mxu0 0.0
      %760 = vmatprep.subr.mxu0 0.0
      %761 = vmatpush1.msra.mxu0 %v718
      %762 = vmatprep.subr.mxu0 0.0
      %763 = vmatpush1.msra.mxu0 %v717
      %764 = vmatprep.subr.mxu0 0.0
      %765 = vmatpush2.msra.mxu0 0.0
      %766 = vmatprep.subr.mxu0 0.0
      %767 = vmatpush2.msra.mxu0 0.0
      %768 = vmatprep.subr.mxu0 0.0
      %769 = vmatpush2.msra.mxu0 0.0
      %770 = vmatprep.subr.mxu0 0.0
      %771 = vmatpush2.msra.mxu0 0.0
      %772 = vmatprep.subr.mxu0 0.0
      %773 = vmatpush2.msra.mxu0 0.0
      %774 = vmatprep.subr.mxu0 0.0
      %775 = vmatpush2.msra.mxu0 0.0
      %776 = vmatprep.subr.mxu0 0.0
      %777 = vmatpush2.msra.mxu0 0.0
      %778 = vmatprep.subr.mxu0 0.0
      %779 = vmatpush2.msra.mxu0 0.0
      %780 = vmatprep.subr.mxu0 0.0
      %781 = vmatpush2.msra.mxu0 0.0
      %782 = vmatprep.subr.mxu0 0.0
      %783 = vmatpush2.msra.mxu0 0.0
      %784 = vmatprep.subr.mxu0 0.0
      %785 = vmatpush2.msra.mxu0 0.0
      %786 = vmatprep.subr.mxu0 0.0
      %787 = vmatpush2.msra.mxu0 0.0
      %788 = vmatprep.subr.mxu0 0.0
      %789 = vmatpush2.msra.mxu0 0.0
      %790 = vmatprep.subr.mxu0 0.0
      %791 = vmatpush2.msra.mxu0 0.0
      %792 = vmatprep.subr.mxu0 0.0
      %793 = vmatpush2.msra.mxu0 0.0
      %794 = vmatprep.subr.mxu0 0.0
      %795 = vmatpush2.msra.mxu0 0.0
      %796 = vmatprep.mubr.f32.mxu0 0.0
      %797 = vmatmul.mubr.f32.gmra.mxu0 %v727
      %v798 = vpop.f32.mrf.mxu0
      %v799 = vadd.f32 %v724, %v798
      %v800 = vpop.f32.mrf.mxu0
      %801 = vmatprep.mubr.f32.mxu0 0.0
      %802 = vmatmul.mubr.f32.gmra.mxu0 %v730
      %v803 = vpop.f32.mrf.mxu0
      %v804 = vadd.f32 %v724, %v803
      %v805 = vpop.f32.mrf.mxu0
      %806 = vdwg.mxu0
      %v807 = vxor.u32 %v799, 2147483648
      %v808 = vxor.u32 %v804, 2147483648
      %v809 = vmul.f32 %v807, 1.442695
      %v810 = vpow.pop %v809
      %v811 = vmul.f32 %v808, 1.442695
      %v812 = vpow.pop %v811
      %v813 = vadd.f32 %v810, 1.0
      %v814 = vadd.f32 %v812, 1.0
      %v815 = vrcp.pop %v813
      %v816 = vmul.f32 1.0, %v815
      %v817 = vrcp.pop %v814
      %v818 = vmul.f32 1.0, %v817
      %v819 = vld [vmem:[%s2] sm:$0xff]
      %v820 = vld [vmem:[%s2 + $0x8] sm:$0xff]
      %823 = vrot.lane.b32.xlu0 %v816, 112
      %v824 = vpop.permute.xlu0 %823
      %825 = vrot.lane.b32.xlu0 %v818, 112
      %v826 = vpop.permute.xlu0 %825
      %829 = vxpose.xlu0.b32.start [1/16] %v824, 128
      %830 = vxpose.xlu0.b32.cont [2/16] %v826, 128
      %831 = vxpose.xlu0.b32.cont [3/16] 0.0, 128
      %832 = vxpose.xlu0.b32.cont [4/16] 0.0, 128
      %833 = vxpose.xlu0.b32.cont [5/16] 0.0, 128
      %834 = vxpose.xlu0.b32.cont [6/16] 0.0, 128
      %835 = vxpose.xlu0.b32.cont [7/16] 0.0, 128
      %836 = vxpose.xlu0.b32.cont [8/16] 0.0, 128
      %837 = vxpose.xlu0.b32.cont [9/16] 0.0, 128
      %838 = vxpose.xlu0.b32.cont [10/16] 0.0, 128
      %839 = vxpose.xlu0.b32.cont [11/16] 0.0, 128
      %840 = vxpose.xlu0.b32.cont [12/16] 0.0, 128
      %841 = vxpose.xlu0.b32.cont [13/16] 0.0, 128
      %842 = vxpose.xlu0.b32.cont [14/16] 0.0, 128
      %843 = vxpose.xlu0.b32.cont [15/16] 0.0, 128
      %844 = vxpose.xlu0.b32.end [16/16] 0.0, 128
      %v845 = vpop.trf.xlu0
      %v846 = vpop.trf.xlu0
      %v847 = vpop.trf.xlu0
      %v848 = vpop.trf.xlu0
      %v849 = vpop.trf.xlu0
      %v850 = vpop.trf.xlu0
      %v851 = vpop.trf.xlu0
      %v852 = vpop.trf.xlu0
      %v853 = vpop.trf.xlu0
      %v854 = vpop.trf.xlu0
      %v855 = vpop.trf.xlu0
      %v856 = vpop.trf.xlu0
      %v857 = vpop.trf.xlu0
      %v858 = vpop.trf.xlu0
      %v859 = vpop.trf.xlu0
      %v860 = vpop.trf.xlu0
      %863 = vrot.lane.b32.xlu0 %v799, 96
      %v864 = vpop.permute.xlu0 %863
      %865 = vrot.lane.b32.xlu0 %v804, 96
      %v866 = vpop.permute.xlu0 %865
      %v870 = vsel %vm415, %v845, 0
      %v873 = vsel %vm415, %v846, 0
      %875 = vmatprep.subr.mxu0 0.0
      %876 = vmatpush1.msra.mxu0 0.0
      %877 = vmatprep.subr.mxu0 0.0
      %878 = vmatpush1.msra.mxu0 0.0
      %879 = vmatprep.subr.mxu0 0.0
      %880 = vmatpush1.msra.mxu0 0.0
      %881 = vmatprep.subr.mxu0 0.0
      %882 = vmatpush1.msra.mxu0 0.0
      %883 = vmatprep.subr.mxu0 0.0
      %884 = vmatpush1.msra.mxu0 0.0
      %885 = vmatprep.subr.mxu0 0.0
      %886 = vmatpush1.msra.mxu0 0.0
      %887 = vmatprep.subr.mxu0 0.0
      %888 = vmatpush1.msra.mxu0 0.0
      %889 = vmatprep.subr.mxu0 0.0
      %890 = vmatpush1.msra.mxu0 0.0
      %891 = vmatprep.subr.mxu0 0.0
      %892 = vmatpush1.msra.mxu0 0.0
      %893 = vmatprep.subr.mxu0 0.0
      %894 = vmatpush1.msra.mxu0 0.0
      %895 = vmatprep.subr.mxu0 0.0
      %896 = vmatpush1.msra.mxu0 0.0
      %897 = vmatprep.subr.mxu0 0.0
      %898 = vmatpush1.msra.mxu0 0.0
      %899 = vmatprep.subr.mxu0 0.0
      %900 = vmatpush1.msra.mxu0 0.0
      %901 = vmatprep.subr.mxu0 0.0
      %902 = vmatpush1.msra.mxu0 0.0
      %903 = vmatprep.subr.mxu0 0.0
      %904 = vmatpush1.msra.mxu0 %v866
      %905 = vmatprep.subr.mxu0 0.0
      %906 = vmatpush1.msra.mxu0 %v864
      %907 = vmatprep.subr.mxu0 0.0
      %908 = vmatpush2.msra.mxu0 0.0
      %909 = vmatprep.subr.mxu0 0.0
      %910 = vmatpush2.msra.mxu0 0.0
      %911 = vmatprep.subr.mxu0 0.0
      %912 = vmatpush2.msra.mxu0 0.0
      %913 = vmatprep.subr.mxu0 0.0
      %914 = vmatpush2.msra.mxu0 0.0
      %915 = vmatprep.subr.mxu0 0.0
      %916 = vmatpush2.msra.mxu0 0.0
      %917 = vmatprep.subr.mxu0 0.0
      %918 = vmatpush2.msra.mxu0 0.0
      %919 = vmatprep.subr.mxu0 0.0
      %920 = vmatpush2.msra.mxu0 0.0
      %921 = vmatprep.subr.mxu0 0.0
      %922 = vmatpush2.msra.mxu0 0.0
      %923 = vmatprep.subr.mxu0 0.0
      %924 = vmatpush2.msra.mxu0 0.0
      %925 = vmatprep.subr.mxu0 0.0
      %926 = vmatpush2.msra.mxu0 0.0
      %927 = vmatprep.subr.mxu0 0.0
      %928 = vmatpush2.msra.mxu0 0.0
      %929 = vmatprep.subr.mxu0 0.0
      %930 = vmatpush2.msra.mxu0 0.0
      %931 = vmatprep.subr.mxu0 0.0
      %932 = vmatpush2.msra.mxu0 0.0
      %933 = vmatprep.subr.mxu0 0.0
      %934 = vmatpush2.msra.mxu0 0.0
      %935 = vmatprep.subr.mxu0 0.0
      %936 = vmatpush2.msra.mxu0 0.0
      %937 = vmatprep.subr.mxu0 0.0
      %938 = vmatpush2.msra.mxu0 0.0
      %939 = vmatprep.mubr.f32.mxu0 0.0
      %940 = vmatmul.mubr.f32.gmra.mxu0 %v870
      %v941 = vpop.f32.mrf.mxu0
      %v942 = vadd.f32 0.0, %v941
      %v943 = vpop.f32.mrf.mxu0
      %944 = vmatprep.mubr.f32.mxu0 0.0
      %945 = vmatmul.mubr.f32.gmra.mxu0 %v873
      %v946 = vpop.f32.mrf.mxu0
      %v947 = vadd.f32 0.0, %v946
      %v948 = vpop.f32.mrf.mxu0
      %949 = vdwg.mxu0
      %v950 = vmul.f32 %v942, %v819
      %v951 = vmul.f32 %v947, %v820
      %vm952 = vcmask 261248
      %v953 = vsel %vm952, %v816, 0.0
      %v954 = vsel %vm952, %v818, 0.0
      %v955 = vadd.f32 %v953, %v954
      %v956 = vrot.slane %v955, 4
      %v957 = vadd.f32 %v955, %v956
      %v958 = vrot.slane %v957, 2
      %v959 = vadd.f32 %v957, %v958
      %v960 = vrot.slane %v959, 1
      %v961 = vadd.f32 %v959, %v960
      %v962 = vadd.f32 %v961, 1e-06
      %964 = vrot.lane.b32.xlu0 %v962, 112
      %v965 = vpop.permute.xlu0 %964
      %v967 = vmul.f32 %v816, %v965
      %v968 = vmul.f32 %v818, %v965
      %v970 = vsel %vm415, %v967, 0
      %v973 = vsel %vm415, %v968, 0
      %975 = vmatprep.subr.mxu0 0.0
      %976 = vmatpush1.msra.mxu0 0.0
      %977 = vmatprep.subr.mxu0 0.0
      %978 = vmatpush1.msra.mxu0 0.0
      %979 = vmatprep.subr.mxu0 0.0
      %980 = vmatpush1.msra.mxu0 0.0
      %981 = vmatprep.subr.mxu0 0.0
      %982 = vmatpush1.msra.mxu0 0.0
      %983 = vmatprep.subr.mxu0 0.0
      %984 = vmatpush1.msra.mxu0 0.0
      %985 = vmatprep.subr.mxu0 0.0
      %986 = vmatpush1.msra.mxu0 0.0
      %987 = vmatprep.subr.mxu0 0.0
      %988 = vmatpush1.msra.mxu0 0.0
      %989 = vmatprep.subr.mxu0 0.0
      %990 = vmatpush1.msra.mxu0 0.0
      %991 = vmatprep.subr.mxu0 0.0
      %992 = vmatpush1.msra.mxu0 0.0
      %993 = vmatprep.subr.mxu0 0.0
      %994 = vmatpush1.msra.mxu0 0.0
      %995 = vmatprep.subr.mxu0 0.0
      %996 = vmatpush1.msra.mxu0 0.0
      %997 = vmatprep.subr.mxu0 0.0
      %998 = vmatpush1.msra.mxu0 0.0
      %999 = vmatprep.subr.mxu0 0.0
      %1000 = vmatpush1.msra.mxu0 0.0
      %1001 = vmatprep.subr.mxu0 0.0
      %1002 = vmatpush1.msra.mxu0 0.0
      %1003 = vmatprep.subr.mxu0 0.0
      %1004 = vmatpush1.msra.mxu0 %v820
      %1005 = vmatprep.subr.mxu0 0.0
      %1006 = vmatpush1.msra.mxu0 %v819
      %1007 = vmatprep.subr.mxu0 0.0
      %1008 = vmatpush2.msra.mxu0 0.0
      %1009 = vmatprep.subr.mxu0 0.0
      %1010 = vmatpush2.msra.mxu0 0.0
      %1011 = vmatprep.subr.mxu0 0.0
      %1012 = vmatpush2.msra.mxu0 0.0
      %1013 = vmatprep.subr.mxu0 0.0
      %1014 = vmatpush2.msra.mxu0 0.0
      %1015 = vmatprep.subr.mxu0 0.0
      %1016 = vmatpush2.msra.mxu0 0.0
      %1017 = vmatprep.subr.mxu0 0.0
      %1018 = vmatpush2.msra.mxu0 0.0
      %1019 = vmatprep.subr.mxu0 0.0
      %1020 = vmatpush2.msra.mxu0 0.0
      %1021 = vmatprep.subr.mxu0 0.0
      %1022 = vmatpush2.msra.mxu0 0.0
      %1023 = vmatprep.subr.mxu0 0.0
      %1024 = vmatpush2.msra.mxu0 0.0
      %1025 = vmatprep.subr.mxu0 0.0
      %1026 = vmatpush2.msra.mxu0 0.0
      %1027 = vmatprep.subr.mxu0 0.0
      %1028 = vmatpush2.msra.mxu0 0.0
      %1029 = vmatprep.subr.mxu0 0.0
      %1030 = vmatpush2.msra.mxu0 0.0
      %1031 = vmatprep.subr.mxu0 0.0
      %1032 = vmatpush2.msra.mxu0 0.0
      %1033 = vmatprep.subr.mxu0 0.0
      %1034 = vmatpush2.msra.mxu0 0.0
      %1035 = vmatprep.subr.mxu0 0.0
      %1036 = vmatpush2.msra.mxu0 0.0
      %1037 = vmatprep.subr.mxu0 0.0
      %1038 = vmatpush2.msra.mxu0 0.0
      %1039 = vmatprep.mubr.f32.mxu0 0.0
      %1040 = vmatmul.mubr.f32.gmra.mxu0 %v970
      %v1041 = vpop.f32.mrf.mxu0
      %v1042 = vadd.f32 0.0, %v1041
      %v1043 = vpop.f32.mrf.mxu0
      %1044 = vmatprep.mubr.f32.mxu0 0.0
      %1045 = vmatmul.mubr.f32.gmra.mxu0 %v973
      %v1046 = vpop.f32.mrf.mxu0
      %v1047 = vadd.f32 0.0, %v1046
      %v1048 = vpop.f32.mrf.mxu0
      %1049 = vdwg.mxu0
      %v1050 = vrcp.pop %v1042
      %v1051 = vrcp.pop %v1047
      %v1052 = vmul.f32 %v1042, %v1050
      %v1053 = vmul.f32 %v1047, %v1051
      %v1054 = vsub.f32 2.0, %v1052
      %v1055 = vsub.f32 2.0, %v1053
      %v1056 = vmul.f32 %v1050, %v1054
      %v1057 = vmul.f32 %v1051, %v1055
      %v1058 = vsel %vm415, %v816, 0
      %v1060 = vsel %vm415, %v818, 0
      %1062 = vmatprep.subr.mxu0 0.0
      %1063 = vmatpush1.msra.mxu0 0.0
      %1064 = vmatprep.subr.mxu0 0.0
      %1065 = vmatpush1.msra.mxu0 0.0
      %1066 = vmatprep.subr.mxu0 0.0
      %1067 = vmatpush1.msra.mxu0 0.0
      %1068 = vmatprep.subr.mxu0 0.0
      %1069 = vmatpush1.msra.mxu0 0.0
      %1070 = vmatprep.subr.mxu0 0.0
      %1071 = vmatpush1.msra.mxu0 0.0
      %1072 = vmatprep.subr.mxu0 0.0
      %1073 = vmatpush1.msra.mxu0 0.0
      %1074 = vmatprep.subr.mxu0 0.0
      %1075 = vmatpush1.msra.mxu0 0.0
      %1076 = vmatprep.subr.mxu0 0.0
      %1077 = vmatpush1.msra.mxu0 0.0
      %1078 = vmatprep.subr.mxu0 0.0
      %1079 = vmatpush1.msra.mxu0 0.0
      %1080 = vmatprep.subr.mxu0 0.0
      %1081 = vmatpush1.msra.mxu0 0.0
      %1082 = vmatprep.subr.mxu0 0.0
      %1083 = vmatpush1.msra.mxu0 0.0
      %1084 = vmatprep.subr.mxu0 0.0
      %1085 = vmatpush1.msra.mxu0 0.0
      %1086 = vmatprep.subr.mxu0 0.0
      %1087 = vmatpush1.msra.mxu0 0.0
      %1088 = vmatprep.subr.mxu0 0.0
      %1089 = vmatpush1.msra.mxu0 0.0
      %1090 = vmatprep.subr.mxu0 0.0
      %1091 = vmatpush1.msra.mxu0 %v951
      %1092 = vmatprep.subr.mxu0 0.0
      %1093 = vmatpush1.msra.mxu0 %v950
      %1094 = vmatprep.subr.mxu0 0.0
      %1095 = vmatpush2.msra.mxu0 0.0
      %1096 = vmatprep.subr.mxu0 0.0
      %1097 = vmatpush2.msra.mxu0 0.0
      %1098 = vmatprep.subr.mxu0 0.0
      %1099 = vmatpush2.msra.mxu0 0.0
      %1100 = vmatprep.subr.mxu0 0.0
      %1101 = vmatpush2.msra.mxu0 0.0
      %1102 = vmatprep.subr.mxu0 0.0
      %1103 = vmatpush2.msra.mxu0 0.0
      %1104 = vmatprep.subr.mxu0 0.0
      %1105 = vmatpush2.msra.mxu0 0.0
      %1106 = vmatprep.subr.mxu0 0.0
      %1107 = vmatpush2.msra.mxu0 0.0
      %1108 = vmatprep.subr.mxu0 0.0
      %1109 = vmatpush2.msra.mxu0 0.0
      %1110 = vmatprep.subr.mxu0 0.0
      %1111 = vmatpush2.msra.mxu0 0.0
      %1112 = vmatprep.subr.mxu0 0.0
      %1113 = vmatpush2.msra.mxu0 0.0
      %1114 = vmatprep.subr.mxu0 0.0
      %1115 = vmatpush2.msra.mxu0 0.0
      %1116 = vmatprep.subr.mxu0 0.0
      %1117 = vmatpush2.msra.mxu0 0.0
      %1118 = vmatprep.subr.mxu0 0.0
      %1119 = vmatpush2.msra.mxu0 0.0
      %1120 = vmatprep.subr.mxu0 0.0
      %1121 = vmatpush2.msra.mxu0 0.0
      %1122 = vmatprep.subr.mxu0 0.0
      %1123 = vmatpush2.msra.mxu0 0.0
      %1124 = vmatprep.subr.mxu0 0.0
      %1125 = vmatpush2.msra.mxu0 0.0
      %1126 = vmatprep.mubr.f32.mxu0 0.0
      %1127 = vmatmul.mubr.f32.gmra.mxu0 %v1058
      %v1128 = vpop.f32.mrf.mxu0
      %v1129 = vadd.f32 0.0, %v1128
      %v1130 = vpop.f32.mrf.mxu0
      %1131 = vmatprep.mubr.f32.mxu0 0.0
      %1132 = vmatmul.mubr.f32.gmra.mxu0 %v1060
      %v1133 = vpop.f32.mrf.mxu0
      %v1134 = vadd.f32 0.0, %v1133
      %v1135 = vpop.f32.mrf.mxu0
      %1136 = vdwg.mxu0
      %v1137 = vmul.f32 %v1129, %v1056
      %v1138 = vmul.f32 %v1134, %v1057
      %v1139 = vld [vmem:[%s7] sm:$0xff]
      %v1140 = vld [vmem:[%s7 + $0x8] sm:$0xff]
      %v1141 = vld [vmem:[%s8] sm:$0x1]
      %v1143 = vlaneseq
      %v1144 = vshrl.u32 %v1143, 7
      %v1145 = vsub.s32 0, %v1144
      %v1146 = vrot.slane %v1141, %v1145
      %v1149 = vsel %vm415, %v1137, 0
      %v1152 = vsel %vm415, %v1138, 0
      %1154 = vmatprep.subr.mxu0 0.0
      %1155 = vmatpush1.msra.mxu0 0.0
      %1156 = vmatprep.subr.mxu0 0.0
      %1157 = vmatpush1.msra.mxu0 0.0
      %1158 = vmatprep.subr.mxu0 0.0
      %1159 = vmatpush1.msra.mxu0 0.0
      %1160 = vmatprep.subr.mxu0 0.0
      %1161 = vmatpush1.msra.mxu0 0.0
      %1162 = vmatprep.subr.mxu0 0.0
      %1163 = vmatpush1.msra.mxu0 0.0
      %1164 = vmatprep.subr.mxu0 0.0
      %1165 = vmatpush1.msra.mxu0 0.0
      %1166 = vmatprep.subr.mxu0 0.0
      %1167 = vmatpush1.msra.mxu0 0.0
      %1168 = vmatprep.subr.mxu0 0.0
      %1169 = vmatpush1.msra.mxu0 0.0
      %1170 = vmatprep.subr.mxu0 0.0
      %1171 = vmatpush1.msra.mxu0 0.0
      %1172 = vmatprep.subr.mxu0 0.0
      %1173 = vmatpush1.msra.mxu0 0.0
      %1174 = vmatprep.subr.mxu0 0.0
      %1175 = vmatpush1.msra.mxu0 0.0
      %1176 = vmatprep.subr.mxu0 0.0
      %1177 = vmatpush1.msra.mxu0 0.0
      %1178 = vmatprep.subr.mxu0 0.0
      %1179 = vmatpush1.msra.mxu0 0.0
      %1180 = vmatprep.subr.mxu0 0.0
      %1181 = vmatpush1.msra.mxu0 0.0
      %1182 = vmatprep.subr.mxu0 0.0
      %1183 = vmatpush1.msra.mxu0 %v1140
      %1184 = vmatprep.subr.mxu0 0.0
      %1185 = vmatpush1.msra.mxu0 %v1139
      %1186 = vmatprep.subr.mxu0 0.0
      %1187 = vmatpush2.msra.mxu0 0.0
      %1188 = vmatprep.subr.mxu0 0.0
      %1189 = vmatpush2.msra.mxu0 0.0
      %1190 = vmatprep.subr.mxu0 0.0
      %1191 = vmatpush2.msra.mxu0 0.0
      %1192 = vmatprep.subr.mxu0 0.0
      %1193 = vmatpush2.msra.mxu0 0.0
      %1194 = vmatprep.subr.mxu0 0.0
      %1195 = vmatpush2.msra.mxu0 0.0
      %1196 = vmatprep.subr.mxu0 0.0
      %1197 = vmatpush2.msra.mxu0 0.0
      %1198 = vmatprep.subr.mxu0 0.0
      %1199 = vmatpush2.msra.mxu0 0.0
      %1200 = vmatprep.subr.mxu0 0.0
      %1201 = vmatpush2.msra.mxu0 0.0
      %1202 = vmatprep.subr.mxu0 0.0
      %1203 = vmatpush2.msra.mxu0 0.0
      %1204 = vmatprep.subr.mxu0 0.0
      %1205 = vmatpush2.msra.mxu0 0.0
      %1206 = vmatprep.subr.mxu0 0.0
      %1207 = vmatpush2.msra.mxu0 0.0
      %1208 = vmatprep.subr.mxu0 0.0
      %1209 = vmatpush2.msra.mxu0 0.0
      %1210 = vmatprep.subr.mxu0 0.0
      %1211 = vmatpush2.msra.mxu0 0.0
      %1212 = vmatprep.subr.mxu0 0.0
      %1213 = vmatpush2.msra.mxu0 0.0
      %1214 = vmatprep.subr.mxu0 0.0
      %1215 = vmatpush2.msra.mxu0 0.0
      %1216 = vmatprep.subr.mxu0 0.0
      %1217 = vmatpush2.msra.mxu0 0.0
      %1218 = vmatprep.mubr.f32.mxu0 0.0
      %1219 = vmatmul.mubr.f32.gmra.mxu0 %v1149
      %v1220 = vpop.f32.mrf.mxu0
      %v1221 = vadd.f32 %v1146, %v1220
      %v1222 = vpop.f32.mrf.mxu0
      %1223 = vmatprep.mubr.f32.mxu0 0.0
      %1224 = vmatmul.mubr.f32.gmra.mxu0 %v1152
      %v1225 = vpop.f32.mrf.mxu0
      %v1226 = vadd.f32 %v1146, %v1225
      %v1227 = vpop.f32.mrf.mxu0
      %1228 = vdwg.mxu0
      %1230 = vset.pattern.permute.xlu0 0
      %1231 = vperm.xlu0 %1230, %v407
      %v1232 = vpop.permute.xlu0 %1231
      %1235 = vset.pattern.permute.xlu0 0
      %1236 = vperm.xlu0 %1235, %v408
      %v1237 = vpop.permute.xlu0 %1236
      %v1239 = vmul.f32 %v1221, %v1232
      %v1240 = vmul.f32 %v1226, %v1237
      %v1241 = vmul.f32 %v1239, 0.7
      %v1242 = vmul.f32 %v1240, 0.7
      %v1243 = vadd.f32 %v1241, %v686
      %v1244 = vadd.f32 %v1242, %v687
      %v1245 = vld [vmem:[%s9] sm:$0xff]
      %v1246 = vld [vmem:[%s9 + $0x8] sm:$0xff]
      %v1247 = vld [vmem:[%s10] sm:$0x1]
      %v1249 = vlaneseq
      %v1250 = vshrl.u32 %v1249, 7
      %v1251 = vsub.s32 0, %v1250
      %v1252 = vrot.slane %v1247, %v1251
      %v1255 = vsel %vm415, %v1243, 0
      %v1258 = vsel %vm415, %v1244, 0
      %1260 = vmatprep.subr.mxu0 0.0
      %1261 = vmatpush1.msra.mxu0 0.0
      %1262 = vmatprep.subr.mxu0 0.0
      %1263 = vmatpush1.msra.mxu0 0.0
      %1264 = vmatprep.subr.mxu0 0.0
      %1265 = vmatpush1.msra.mxu0 0.0
      %1266 = vmatprep.subr.mxu0 0.0
      %1267 = vmatpush1.msra.mxu0 0.0
      %1268 = vmatprep.subr.mxu0 0.0
      %1269 = vmatpush1.msra.mxu0 0.0
      %1270 = vmatprep.subr.mxu0 0.0
      %1271 = vmatpush1.msra.mxu0 0.0
      %1272 = vmatprep.subr.mxu0 0.0
      %1273 = vmatpush1.msra.mxu0 0.0
      %1274 = vmatprep.subr.mxu0 0.0
      %1275 = vmatpush1.msra.mxu0 0.0
      %1276 = vmatprep.subr.mxu0 0.0
      %1277 = vmatpush1.msra.mxu0 0.0
      %1278 = vmatprep.subr.mxu0 0.0
      %1279 = vmatpush1.msra.mxu0 0.0
      %1280 = vmatprep.subr.mxu0 0.0
      %1281 = vmatpush1.msra.mxu0 0.0
      %1282 = vmatprep.subr.mxu0 0.0
      %1283 = vmatpush1.msra.mxu0 0.0
      %1284 = vmatprep.subr.mxu0 0.0
      %1285 = vmatpush1.msra.mxu0 0.0
      %1286 = vmatprep.subr.mxu0 0.0
      %1287 = vmatpush1.msra.mxu0 0.0
      %1288 = vmatprep.subr.mxu0 0.0
      %1289 = vmatpush1.msra.mxu0 %v1246
      %1290 = vmatprep.subr.mxu0 0.0
      %1291 = vmatpush1.msra.mxu0 %v1245
      %1292 = vmatprep.subr.mxu0 0.0
      %1293 = vmatpush2.msra.mxu0 0.0
      %1294 = vmatprep.subr.mxu0 0.0
      %1295 = vmatpush2.msra.mxu0 0.0
      %1296 = vmatprep.subr.mxu0 0.0
      %1297 = vmatpush2.msra.mxu0 0.0
      %1298 = vmatprep.subr.mxu0 0.0
      %1299 = vmatpush2.msra.mxu0 0.0
      %1300 = vmatprep.subr.mxu0 0.0
      %1301 = vmatpush2.msra.mxu0 0.0
      %1302 = vmatprep.subr.mxu0 0.0
      %1303 = vmatpush2.msra.mxu0 0.0
      %1304 = vmatprep.subr.mxu0 0.0
      %1305 = vmatpush2.msra.mxu0 0.0
      %1306 = vmatprep.subr.mxu0 0.0
      %1307 = vmatpush2.msra.mxu0 0.0
      %1308 = vmatprep.subr.mxu0 0.0
      %1309 = vmatpush2.msra.mxu0 0.0
      %1310 = vmatprep.subr.mxu0 0.0
      %1311 = vmatpush2.msra.mxu0 0.0
      %1312 = vmatprep.subr.mxu0 0.0
      %1313 = vmatpush2.msra.mxu0 0.0
      %1314 = vmatprep.subr.mxu0 0.0
      %1315 = vmatpush2.msra.mxu0 0.0
      %1316 = vmatprep.subr.mxu0 0.0
      %1317 = vmatpush2.msra.mxu0 0.0
      %1318 = vmatprep.subr.mxu0 0.0
      %1319 = vmatpush2.msra.mxu0 0.0
      %1320 = vmatprep.subr.mxu0 0.0
      %1321 = vmatpush2.msra.mxu0 0.0
      %1322 = vmatprep.subr.mxu0 0.0
      %1323 = vmatpush2.msra.mxu0 0.0
      %1324 = vmatprep.mubr.f32.mxu0 0.0
      %1325 = vmatmul.mubr.f32.gmra.mxu0 %v1255
      %v1326 = vpop.f32.mrf.mxu0
      %v1327 = vadd.f32 %v1252, %v1326
      %v1328 = vpop.f32.mrf.mxu0
      %1329 = vmatprep.mubr.f32.mxu0 0.0
      %1330 = vmatmul.mubr.f32.gmra.mxu0 %v1258
      %v1331 = vpop.f32.mrf.mxu0
      %v1332 = vadd.f32 %v1252, %v1331
      %v1333 = vpop.f32.mrf.mxu0
      %1334 = vdwg.mxu0
      %vm1337 = vcmask 1041408
      %v1338 = vrot.slane %v1327, 6
      %v1339 = vrot.slane %v1332, 6
      %v1340 = vsel %vm1337, %v1338, %v1339
      %v1344 = vadd.f32 %v409, %v1338
      %v1345 = vadd.f32 %v410, %v1340
      %v1346 = vadd.f32 %v411, %v1339
      %v1347 = vrot.slane %v1232, 6
      %v1348 = vrot.slane %v1237, 6
      %v1349 = vsel %vm1337, %v1347, %v1348
      %v1353 = vmul.f32 %v1344, %v1347
      %v1354 = vmul.f32 %v1345, %v1349
      %v1355 = vmul.f32 %v1346, %v1348
      %vm1356 = vcmask 130050
      %1357 = vst.msk [vmem:[%s406 - $0x2] sm:$0xfc] %vm1356, %v1353
      %1358 = vst.msk [vmem:[%s406 + $0x6] sm:$0xff] %vm415, %v1354
      %vm1359 = vcmask 123904
      %1360 = vst.msk [vmem:[%s406 + $0xe] sm:$0x3] %vm1359, %v1355
      %p1361 = scmp.lt.s32.totalorder %s22, 1
      %s1362 = scalar_select %p1361, %s22, 1
      %s1363 = smul.addr %s1362, 2
      %s1364 = smul.addr %s1363, 8
      %s1365 = scalar_lea.vmem %s11, %s1364
      // Predicated region
      $region65: #{linear_att_forward.1} parent=63 // pred_check
        %p1366 = pneg %p281
      $region66: #{linear_att_forward.1} parent=63 // pred_check_branch
        %1368 = sbr.rel (%p1366) target = $region68
      $region67: #{linear_att_forward.1} parent=63 // pred_region
        _
      $region68: #{linear_att_forward.1} parent=63 // pred_fallthru
        _
    $region64: #{linear_att_forward.1} parent=5 // pred_fallthru
      _
    %p1369 = scmp.le.s32.totalorder 2, %s17
    // Predicated region
    $region69: #{linear_att_forward.1} parent=5 // pred_check
      %p1370 = pneg %p1369
    $region70: #{linear_att_forward.1} parent=5 // pred_check_branch
      %1372 = sbr.rel (%p1370) target = $region72
    $region71: #{linear_att_forward.1} parent=5 // pred_region
      %s1373 = ssub.s32 %s17, 2
      // Predicated region
      $region73: #{linear_att_forward.1} parent=71 // pred_check
        %p1374 = pneg %p287
      $region74: #{linear_att_forward.1} parent=71 // pred_check_branch
        %1376 = sbr.rel (%p1374) target = $region76
      $region75: #{linear_att_forward.1} parent=71 // pred_region
        %p1377 = scmp.lt.s32.totalorder %s23, 1
        %s1378 = scalar_select %p1377, %s23, 1
        %s1379 = smul.addr %s1378, 2
        %s1380 = smul.addr %s1379, 8
        %s1381 = scalar_lea.vmem %s11, %s1380
      $region76: #{linear_att_forward.1} parent=71 // pred_fallthru
        _
    $region72: #{linear_att_forward.1} parent=5 // pred_fallthru
      _
  $region6: #{linear_att_forward.1} parent=0 // loop_footer
    %s21 = sadd.s32 1, %s17
  $region7: #{linear_att_forward.1} parent=0 // loop_footer_branch
    %16 = sbr.rel target = $region3
  $region8: #{linear_att_forward.1} parent=0 // loop_exit
    _

</llo_original>
